<compile_context>
chip_gen: v6e
topology: v6e:2x2x1
jax: 0.10.0
libtpu: 0.0.40
codegen_flags: <defaults>
</compile_context>

<pallas_src>
import jax
import jax.numpy as jnp
from jax.experimental import pallas as pl
from jax.experimental.pallas import tpu as pltpu


# ----------------------------------------------------------------------------
# Kernel 1: point MLP (conv1/2/3 + folded BN + ReLU) and running max-pool.
# ----------------------------------------------------------------------------
def _point_mlp_kernel(x_ref,
                      w1_ref, b1_ref,
                      w2_ref, b2_ref,
                      w3_ref, b3_ref,
                      pooled_ref):
    nt = pl.program_id(1)

    x = x_ref[0]                                                  # (TN, C) f32

    # conv1 (+ folded bn1) + relu.  K = 3 -> negligible FLOPs, keep f32.
    h = jnp.dot(x, w1_ref[...], preferred_element_type=jnp.float32)
    h = jnp.maximum(h + b1_ref[...], 0.0)                         # (TN, 64)

    # conv2 (+ folded bn2) + relu: bf16 operands, f32 accumulate.
    h = jnp.dot(h.astype(jnp.bfloat16), w2_ref[...],
                preferred_element_type=jnp.float32)
    h = jnp.maximum(h + b2_ref[...], 0.0)                         # (TN, 128)

    # conv3 (+ folded bn3) + relu: bf16 operands, f32 accumulate.
    h = jnp.dot(h.astype(jnp.bfloat16), w3_ref[...],
                preferred_element_type=jnp.float32)
    h = jnp.maximum(h + b3_ref[...], 0.0)                         # (TN, 1024)

    tile_max = jnp.max(h, axis=0, keepdims=True)                  # (1, 1024)

    # Running max across N tiles; output block stays resident over the
    # "arbitrary" nt axis.  Zero init is safe because ReLU output >= 0.
    @pl.when(nt == 0)
    def _():
        pooled_ref[...] = jnp.zeros_like(pooled_ref)

    pooled_ref[0] = jnp.maximum(pooled_ref[0], tile_max)


# ----------------------------------------------------------------------------
# Kernel 2: FC head (fc1/fc2 + folded BN + ReLU, fc3 padded + identity bias),
# batched over the whole pooled (B, 1024) feature.
# ----------------------------------------------------------------------------
def _fc_head_kernel(g_ref,
                    wf1_ref, bf1_ref,
                    wf2_ref, bf2_ref,
                    wf3_ref, bf3_ref,
                    out_ref):
    g = g_ref[...].astype(jnp.bfloat16)                           # (B, 1024)

    f = jnp.dot(g, wf1_ref[...], preferred_element_type=jnp.float32)
    f = jnp.maximum(f + bf1_ref[...], 0.0)                        # (B, 512)

    f = jnp.dot(f.astype(jnp.bfloat16), wf2_ref[...],
                preferred_element_type=jnp.float32)
    f = jnp.maximum(f + bf2_ref[...], 0.0)                        # (B, 256)

    # fc3 padded to 128 lanes; identity (positions 0/4/8) is folded into bias.
    out_ref[...] = (jnp.dot(f.astype(jnp.bfloat16), wf3_ref[...],
                            preferred_element_type=jnp.float32)
                    + bf3_ref[...])                               # (B, 128)


# ----------------------------------------------------------------------------
# Wrapper
# ----------------------------------------------------------------------------
def stn3d_forward(x_bcn, params):
    """x_bcn: (B, C, N) float32 (PyTorch layout).  Returns (B, 3, 3) float32."""
    B, C, N = x_bcn.shape
    (w1, b1, w2, b2, w3, b3, wf1, bf1, wf2, bf2, wf3p, bf3p) = params

    # Pick an N tile (multiple of 128, capped at 512) and edge-pad N so padded
    # rows are copies of a real point (max-pool result is unchanged).
    n128 = ((N + 127) // 128) * 128
    tn = min(512, n128)
    n_pad = ((n128 + tn - 1) // tn) * tn
    num_nt = n_pad // tn

    x = jnp.transpose(x_bcn, (0, 2, 1))                           # (B, N, C)
    if n_pad != N:
        x = jnp.pad(x, ((0, 0), (0, n_pad - N), (0, 0)), mode="edge")

    const2d = lambda shape: pl.BlockSpec(shape, lambda b, nt: (0, 0))

    pooled = pl.pallas_call(
        _point_mlp_kernel,
        out_shape=jax.ShapeDtypeStruct((B, 1, 1024), jnp.float32),
        grid_spec=pltpu.PrefetchScalarGridSpec(
            num_scalar_prefetch=0,
            grid=(B, num_nt),
            in_specs=[
                pl.BlockSpec((1, tn, C), lambda b, nt: (b, nt, 0)),
                const2d(w1.shape), const2d(b1.shape),
                const2d(w2.shape), const2d(b2.shape),
                const2d(w3.shape), const2d(b3.shape),
            ],
            out_specs=pl.BlockSpec((1, 1, 1024), lambda b, nt: (b, 0, 0)),
        ),
        compiler_params=pltpu.CompilerParams(
            dimension_semantics=("parallel", "arbitrary"),
            vmem_limit_bytes=32 * 1024 * 1024,
        ),
    )(x, w1, b1, w2, b2, w3, b3)

    pooled = pooled.reshape(B, 1024)

    out = pl.pallas_call(
        _fc_head_kernel,
        out_shape=jax.ShapeDtypeStruct((B, 128), jnp.float32),
    )(pooled, wf1, bf1, wf2, bf2, wf3p, bf3p)

    return out[:, :9].reshape(B, 3, 3)


# ----------------------------------------------------------------------------
# Parameter construction: fold inference-mode BatchNorm into weights/biases,
# fold the flattened identity into the fc3 bias, cast MXU weights to bf16.
# ----------------------------------------------------------------------------
def _fold_bn_layer(key, cin, cout, eps=1e-5):
    kw, kb, kg, kbeta, km, kv = jax.random.split(key, 6)
    w = jax.random.normal(kw, (cin, cout), jnp.float32) / jnp.sqrt(float(cin))
    b = 0.1 * jax.random.normal(kb, (cout,), jnp.float32)
    gamma = 1.0 + 0.1 * jax.random.normal(kg, (cout,), jnp.float32)
    beta = 0.1 * jax.random.normal(kbeta, (cout,), jnp.float32)
    mean = 0.1 * jax.random.normal(km, (cout,), jnp.float32)
    var = 1.0 + 0.5 * jax.random.uniform(kv, (cout,), jnp.float32)
    scale = gamma / jnp.sqrt(var + eps)
    w_eff = w * scale[None, :]                     # fold BN scale into weight
    b_eff = (b - mean) * scale + beta
    return w_eff, b_eff.reshape(1, cout)


def init_stn3d_params(key, channel):
    k1, k2, k3, k4, k5, k6 = jax.random.split(key, 6)
    w1, b1 = _fold_bn_layer(k1, channel, 64)       # conv1 + bn1
    w2, b2 = _fold_bn_layer(k2, 64, 128)           # conv2 + bn2
    w3, b3 = _fold_bn_layer(k3, 128, 1024)         # conv3 + bn3
    wf1, bf1 = _fold_bn_layer(k4, 1024, 512)       # fc1 + bn4
    wf2, bf2 = _fold_bn_layer(k5, 512, 256)        # fc2 + bn5

    k6w, k6b = jax.random.split(k6)
    wf3 = jax.random.normal(k6w, (256, 9), jnp.float32) / jnp.sqrt(256.0)
    bf3 = 0.1 * jax.random.normal(k6b, (9,), jnp.float32)
    # Pad fc3 to 128 output lanes (lane-dense store) and fold the flattened
    # 3x3 identity (positions 0, 4, 8) into its bias.
    wf3p = jnp.zeros((256, 128), jnp.float32).at[:, :9].set(wf3)
    bf3p = jnp.zeros((128,), jnp.float32).at[:9].set(bf3)
    bf3p = bf3p.at[jnp.array([0, 4, 8])].add(1.0).reshape(1, 128)

    # bf16 weights for the MXU-dominant matmuls; conv1 (K=3) stays f32.
    return (w1, b1,
            w2.astype(jnp.bfloat16), b2,
            w3.astype(jnp.bfloat16), b3,
            wf1.astype(jnp.bfloat16), bf1,
            wf2.astype(jnp.bfloat16), bf2,
            wf3p.astype(jnp.bfloat16), bf3p)


if __name__ == "__main__":
    key = jax.random.PRNGKey(0)
    kx, kp = jax.random.split(key)

    B, C, N = 2, 3, 16  # batch, point dims (xyz), number of points
    x = jax.random.normal(kx, (B, C, N), jnp.float32)  # PyTorch (B, D, N) layout
    params = init_stn3d_params(kp, C)

    out = stn3d_forward(x, params)
    out = jax.block_until_ready(out)

    assert out.shape == (B, 3, 3), out.shape
    assert out.dtype == jnp.float32
    print("KERNEL_OK")
</pallas_src>

<mosaic_0001>
module attributes {stable_mosaic.version = 11 : i64} {
  func.func @_point_mlp_kernel(%arg0: i32, %arg1: i32, %arg2: memref<1x128x3xf32, #tpu.memory_space<vmem>>, %arg3: memref<3x64xf32, #tpu.memory_space<vmem>>, %arg4: memref<1x64xf32, #tpu.memory_space<vmem>>, %arg5: memref<64x128xbf16, #tpu.memory_space<vmem>>, %arg6: memref<1x128xf32, #tpu.memory_space<vmem>>, %arg7: memref<128x1024xbf16, #tpu.memory_space<vmem>>, %arg8: memref<1x1024xf32, #tpu.memory_space<vmem>>, %arg9: memref<1x1x1024xf32, #tpu.memory_space<vmem>>) attributes {dimension_semantics = [#tpu.dimension_semantics<parallel>, #tpu.dimension_semantics<arbitrary>], iteration_bounds = array<i64: 2, 1>, scalar_prefetch = 0 : i64, scratch_operands = 0 : i64, tpu.core_type = #tpu.core_type<tc>, window_params = [{transform_indices = @transform_0, window_bounds = array<i64: 1, 128, 3>}, {pipeline_mode = #tpu.pipeline_mode<synchronous>, transform_indices = @transform_1, window_bounds = array<i64: 3, 64>}, {pipeline_mode = #tpu.pipeline_mode<synchronous>, transform_indices = @transform_2, window_bounds = array<i64: 1, 64>}, {pipeline_mode = #tpu.pipeline_mode<synchronous>, transform_indices = @transform_3, window_bounds = array<i64: 64, 128>}, {pipeline_mode = #tpu.pipeline_mode<synchronous>, transform_indices = @transform_4, window_bounds = array<i64: 1, 128>}, {pipeline_mode = #tpu.pipeline_mode<synchronous>, transform_indices = @transform_5, window_bounds = array<i64: 128, 1024>}, {pipeline_mode = #tpu.pipeline_mode<synchronous>, transform_indices = @transform_6, window_bounds = array<i64: 1, 1024>}, {transform_indices = @transform_7, window_bounds = array<i64: 1, 1, 1024>}]} {
    %c0 = arith.constant 0 : index
    %c0_0 = arith.constant 0 : index
    %c0_1 = arith.constant 0 : index
    %0 = vector.load %arg2[%c0, %c0_0, %c0_1] : memref<1x128x3xf32, #tpu.memory_space<vmem>>, vector<1x128x3xf32>
    %1 = vector.shape_cast %0 : vector<1x128x3xf32> to vector<128x3xf32>
    %c0_2 = arith.constant 0 : index
    %c0_3 = arith.constant 0 : index
    %2 = vector.load %arg3[%c0_2, %c0_3] : memref<3x64xf32, #tpu.memory_space<vmem>>, vector<3x64xf32>
    %cst = arith.constant dense<0.000000e+00> : vector<128x64xf32>
    %3 = tpu.matmul %1, %2, %cst {dimension_numbers = #tpu.dot_dimension_numbers<[1], [0], [0], [1], [0, 0, 1, 1], [], []>} : vector<128x3xf32>, vector<3x64xf32>, vector<128x64xf32> -> vector<128x64xf32>
    %c0_4 = arith.constant 0 : index
    %c0_5 = arith.constant 0 : index
    %4 = vector.load %arg4[%c0_4, %c0_5] : memref<1x64xf32, #tpu.memory_space<vmem>>, vector<1x64xf32>
    %5 = vector.broadcast %4 : vector<1x64xf32> to vector<128x64xf32>
    %6 = arith.addf %3, %5 : vector<128x64xf32>
    %cst_6 = arith.constant 0.000000e+00 : f32
    %7 = vector.broadcast %cst_6 : f32 to vector<128x64xf32>
    %8 = arith.maximumf %6, %7 : vector<128x64xf32>
    %9 = arith.truncf %8 : vector<128x64xf32> to vector<128x64xbf16>
    %c0_7 = arith.constant 0 : index
    %c0_8 = arith.constant 0 : index
    %10 = vector.load %arg5[%c0_7, %c0_8] : memref<64x128xbf16, #tpu.memory_space<vmem>>, vector<64x128xbf16>
    %cst_9 = arith.constant dense<0.000000e+00> : vector<128x128xf32>
    %11 = tpu.matmul %9, %10, %cst_9 {dimension_numbers = #tpu.dot_dimension_numbers<[1], [0], [0], [1], [0, 0, 1, 1], [], []>} : vector<128x64xbf16>, vector<64x128xbf16>, vector<128x128xf32> -> vector<128x128xf32>
    %c0_10 = arith.constant 0 : index
    %c0_11 = arith.constant 0 : index
    %12 = vector.load %arg6[%c0_10, %c0_11] : memref<1x128xf32, #tpu.memory_space<vmem>>, vector<1x128xf32>
    %13 = vector.broadcast %12 : vector<1x128xf32> to vector<128x128xf32>
    %14 = arith.addf %11, %13 : vector<128x128xf32>
    %cst_12 = arith.constant 0.000000e+00 : f32
    %15 = vector.broadcast %cst_12 : f32 to vector<128x128xf32>
    %16 = arith.maximumf %14, %15 : vector<128x128xf32>
    %17 = arith.truncf %16 : vector<128x128xf32> to vector<128x128xbf16>
    %c0_13 = arith.constant 0 : index
    %c0_14 = arith.constant 0 : index
    %18 = vector.load %arg7[%c0_13, %c0_14] : memref<128x1024xbf16, #tpu.memory_space<vmem>>, vector<128x1024xbf16>
    %cst_15 = arith.constant dense<0.000000e+00> : vector<128x1024xf32>
    %19 = tpu.matmul %17, %18, %cst_15 {dimension_numbers = #tpu.dot_dimension_numbers<[1], [0], [0], [1], [0, 0, 1, 1], [], []>} : vector<128x128xbf16>, vector<128x1024xbf16>, vector<128x1024xf32> -> vector<128x1024xf32>
    %c0_16 = arith.constant 0 : index
    %c0_17 = arith.constant 0 : index
    %20 = vector.load %arg8[%c0_16, %c0_17] : memref<1x1024xf32, #tpu.memory_space<vmem>>, vector<1x1024xf32>
    %21 = vector.broadcast %20 : vector<1x1024xf32> to vector<128x1024xf32>
    %22 = arith.addf %19, %21 : vector<128x1024xf32>
    %cst_18 = arith.constant 0.000000e+00 : f32
    %23 = vector.broadcast %cst_18 : f32 to vector<128x1024xf32>
    %24 = arith.maximumf %22, %23 : vector<128x1024xf32>
    %cst_19 = arith.constant dense<0xFF800000> : vector<1024xf32>
    %25 = vector.multi_reduction <maximumf>, %24, %cst_19 [0] : vector<128x1024xf32> to vector<1024xf32>
    %26 = vector.shape_cast %25 : vector<1024xf32> to vector<1x1024xf32>
    %c0_i32 = arith.constant 0 : i32
    %27 = arith.cmpi eq, %arg1, %c0_i32 : i32
    %28 = arith.extui %27 : i1 to i32
    %c0_i32_20 = arith.constant 0 : i32
    %29 = arith.cmpi ne, %28, %c0_i32_20 : i32
    scf.if %29 {
      %cst_27 = arith.constant 0.000000e+00 : f32
      %36 = vector.broadcast %cst_27 : f32 to vector<1x1x1024xf32>
      %c0_28 = arith.constant 0 : index
      %c0_29 = arith.constant 0 : index
      %c0_30 = arith.constant 0 : index
      %37 = vector.load %arg9[%c0_28, %c0_29, %c0_30] : memref<1x1x1024xf32, #tpu.memory_space<vmem>>, vector<1x1x1024xf32>
      tpu.vector_store %arg9[%c0_28, %c0_29, %c0_30], %36 {strides = array<i32>} : memref<1x1x1024xf32, #tpu.memory_space<vmem>>, vector<1x1x1024xf32>,
    } else {
    }
    %c0_21 = arith.constant 0 : index
    %c0_22 = arith.constant 0 : index
    %c0_23 = arith.constant 0 : index
    %30 = vector.load %arg9[%c0_21, %c0_22, %c0_23] : memref<1x1x1024xf32, #tpu.memory_space<vmem>>, vector<1x1x1024xf32>
    %31 = vector.shape_cast %30 : vector<1x1x1024xf32> to vector<1x1024xf32>
    %32 = arith.maximumf %31, %26 : vector<1x1024xf32>
    %c0_24 = arith.constant 0 : index
    %c0_25 = arith.constant 0 : index
    %c0_26 = arith.constant 0 : index
    %33 = vector.load %arg9[%c0_24, %c0_25, %c0_26] : memref<1x1x1024xf32, #tpu.memory_space<vmem>>, vector<1x1x1024xf32>
    %34 = vector.shape_cast %33 : vector<1x1x1024xf32> to vector<1x1024xf32>
    %35 = vector.shape_cast %32 : vector<1x1024xf32> to vector<1x1x1024xf32>
    tpu.vector_store %arg9[%c0_24, %c0_25, %c0_26], %35 {strides = array<i32>} : memref<1x1x1024xf32, #tpu.memory_space<vmem>>, vector<1x1x1024xf32>,
    return
  }
  func.func @transform_0(%arg0: i32, %arg1: i32) -> (i32, i32, i32) {
    %c0_i32 = arith.constant 0 : i32
    %c0_i32_0 = arith.constant 0 : i32
    return %arg0, %arg1, %c0_i32 : i32, i32, i32
  }
  func.func @transform_1(%arg0: i32, %arg1: i32) -> (i32, i32) {
    %c0_i32 = arith.constant 0 : i32
    %c0_i32_0 = arith.constant 0 : i32
    %c0_i32_1 = arith.constant 0 : i32
    return %c0_i32, %c0_i32_0 : i32, i32
  }
  func.func @transform_2(%arg0: i32, %arg1: i32) -> (i32, i32) {
    %c0_i32 = arith.constant 0 : i32
    %c0_i32_0 = arith.constant 0 : i32
    %c0_i32_1 = arith.constant 0 : i32
    return %c0_i32, %c0_i32_0 : i32, i32
  }
  func.func @transform_3(%arg0: i32, %arg1: i32) -> (i32, i32) {
    %c0_i32 = arith.constant 0 : i32
    %c0_i32_0 = arith.constant 0 : i32
    %c0_i32_1 = arith.constant 0 : i32
    return %c0_i32, %c0_i32_0 : i32, i32
  }
  func.func @transform_4(%arg0: i32, %arg1: i32) -> (i32, i32) {
    %c0_i32 = arith.constant 0 : i32
    %c0_i32_0 = arith.constant 0 : i32
    %c0_i32_1 = arith.constant 0 : i32
    return %c0_i32, %c0_i32_0 : i32, i32
  }
  func.func @transform_5(%arg0: i32, %arg1: i32) -> (i32, i32) {
    %c0_i32 = arith.constant 0 : i32
    %c0_i32_0 = arith.constant 0 : i32
    %c0_i32_1 = arith.constant 0 : i32
    return %c0_i32, %c0_i32_0 : i32, i32
  }
  func.func @transform_6(%arg0: i32, %arg1: i32) -> (i32, i32) {
    %c0_i32 = arith.constant 0 : i32
    %c0_i32_0 = arith.constant 0 : i32
    %c0_i32_1 = arith.constant 0 : i32
    return %c0_i32, %c0_i32_0 : i32, i32
  }
  func.func @transform_7(%arg0: i32, %arg1: i32) -> (i32, i32, i32) {
    %c0_i32 = arith.constant 0 : i32
    %c0_i32_0 = arith.constant 0 : i32
    %c0_i32_1 = arith.constant 0 : i32
    return %arg0, %c0_i32, %c0_i32_0 : i32, i32, i32
  }
}

</mosaic_0001>

<llo_original>
// kernel: tpu_custom_call.1
$region0: #{tpu_custom_call.1}
  #allocation0 [shape = 'u32[]', space=smem, size = 0x4, offset = 0x4, fixed_abs, tag = 'smem constant byte address 0x4 - core index']
  #allocation1 [shape = 'u32[144,128]{1,0:T(1,128)}', space=vmem, size = 0x12000, scoped, tag = 'internal scratch']
  %s0 = inlined_call_operand.vmem [shape: f32[2,128,3], index: 0, kind: input, shape index: {}]
  %s1 = inlined_call_operand.vmem [shape: f32[3,64], index: 1, kind: input, shape index: {}]
  %s2 = inlined_call_operand.vmem [shape: f32[1,64], index: 2, kind: input, shape index: {}]
  %s3 = inlined_call_operand.vmem [shape: bf16[64,128], index: 3, kind: input, shape index: {}]
  %s4 = inlined_call_operand.vmem [shape: f32[1,128], index: 4, kind: input, shape index: {}]
  %s5 = inlined_call_operand.hbm [shape: bf16[128,1024], index: 5, kind: input, shape index: {}]
  %s6 = inlined_call_operand.vmem [shape: f32[1,1024], index: 6, kind: input, shape index: {}]
  %s7 = inlined_call_operand.hbm [shape: f32[2,1,1024], index: 7, kind: output, shape index: {}]
  %s8 = sld [smem:[#allocation0]]
  $region69: #{tpu_custom_call.1} parent=0
    _
  %s10 = ssub.s32 1, %s8
  %s11 = scalar_select 0, %s10, %s8
  $region1: #{tpu_custom_call.1} parent=0
    #allocation2 [shape = 'u8[262144]{0}', space=vmem, size = 0x40000, scoped, tag = 'input window, operand 5, single buffered']
    #allocation3 [shape = 's32[2]{0}', space=sflag, size = 0x8, scoped, tag = 'scoped memory for tpu_custom_call.1']
    #allocation4 [shape = 's32[2]{0}', space=sflag, size = 0x8, scoped, tag = 'scoped memory for tpu_custom_call.1']
    #allocation5 [shape = 'u8[8192]{0}', space=vmem, size = 0x2000, scoped, tag = 'output window, operand 0']
    %12 = vsyncpa [#allocation3], 0
    %13 = vsyncpa [#allocation4], 0
    %s14 = scalar_lea.sflag [#allocation4], 1
    %15 = vsyncpa %s14, 0
    loop: start=0, step=1, limit=4
    $region2: #{tpu_custom_call.1} parent=1 // loop_pre_header
      _
    $region3: #{tpu_custom_call.1} parent=1 // loop_header
      %s17 = sphi 0, %s21
      %p18 = scmp.ge.s32.totalorder %s17, 4
      %s24 = sphi 0, %s36
      %s25 = sphi 0, %s32
      %s26 = sphi 0, %s24
      %s27 = sphi 0, %s25
      %s28 = sphi 0, %s26
      %s29 = sphi 0, %s27
      %s41 = sphi 0, %s43
      %s44 = sphi 0, %s41
      %s45 = sphi 0, %s44
      %s61 = sphi 0, %s45
      %s65 = sphi 0, %s65
      %s67 = sphi 0, %s65
      %s68 = sphi 0, %s67
      %s82 = sphi 0, %s68
      %s86 = sphi 0, %s86
      %s88 = sphi 0, %s86
      %s89 = sphi 0, %s88
      %s103 = sphi 0, %s89
      %s107 = sphi 0, %s107
      %s109 = sphi 0, %s107
      %s110 = sphi 0, %s109
      %s124 = sphi 0, %s110
      %s128 = sphi 0, %s128
      %s130 = sphi 0, %s128
      %s131 = sphi 0, %s130
      %s145 = sphi 0, %s131
      %s149 = sphi 0, %s149
      %s151 = sphi 0, %s149
      %s152 = sphi 0, %s151
      %s166 = sphi 0, %s152
      %s170 = sphi 0, %s170
      %s172 = sphi 0, %s170
      %s173 = sphi 0, %s172
      %s187 = sphi 0, %s173
      %s193 = sphi 0, %s195
      %s196 = sphi 0, %s193
      %s197 = sphi 0, %s196
      %s213 = sphi 0, %s197
    $region4: #{tpu_custom_call.1} parent=1 // loop_header_branch
      %20 = sbr.rel (%p18) target = $region8
    $region5: #{tpu_custom_call.1} parent=1 // loop_body
      %s22 = ssub.s32 %s17, 1
      %s23 = ssub.s32 %s17, 2
      %s30 = sadd.s32 1, %s25
      %p31 = scmp.ge.s32.totalorder %s30, 1
      %s32 = scalar_select %p31, 0, %s30
      %s33 = sadd.s32 1, %s24
      %s34 = scalar_select %p31, %s33, %s24
      %p35 = scmp.ge.s32.totalorder %s34, 2
      %s36 = scalar_select %p35, 0, %s34
      %s37 = ssub.s32 %s24, %s36
      %s38 = ssub.s32 %s25, %s32
      %s39 = sor.u32 %s37, %s38
      %p40 = scmp.eq.s32.totalorder %s39, 0
      %s42 = sadd.s32 %s41, 1
      %s43 = scalar_select %p40, %s41, %s42
      %p46 = pneg %p40
      %p47 = scmp.eq.s32.totalorder %s17, 1
      %p48 = por %p46, %p47
      %p49 = scmp.ne.s32.totalorder %s41, %s44
      %p50 = scmp.eq.s32.totalorder %s17, 0
      %p51 = por %p49, %p50
      %p52 = scmp.ne.s32.totalorder %s41, %s44
      %p53 = scmp.eq.s32.totalorder %s22, 1
      %p54 = por %p52, %p53
      %p55 = scmp.ne.s32.totalorder %s44, %s45
      %p56 = scmp.eq.s32.totalorder %s22, 0
      %p57 = por %p55, %p56
      %p58 = scmp.ne.s32.totalorder %s44, %s45
      %p59 = scmp.eq.s32.totalorder %s23, 1
      %p60 = por %p58, %p59
      %p62 = scmp.ne.s32.totalorder %s45, %s61
      %p63 = scmp.eq.s32.totalorder %s23, 0
      %p64 = por %p62, %p63
      %s66 = sadd.s32 %s65, 1
      %p69 = scmp.eq.s32.totalorder %s17, 1
      %p70 = scmp.ne.s32.totalorder %s65, %s67
      %p71 = scmp.eq.s32.totalorder %s17, 0
      %p72 = por %p70, %p71
      %p73 = scmp.ne.s32.totalorder %s65, %s67
      %p74 = scmp.eq.s32.totalorder %s22, 1
      %p75 = por %p73, %p74
      %p76 = scmp.ne.s32.totalorder %s67, %s68
      %p77 = scmp.eq.s32.totalorder %s22, 0
      %p78 = por %p76, %p77
      %p79 = scmp.ne.s32.totalorder %s67, %s68
      %p80 = scmp.eq.s32.totalorder %s23, 1
      %p81 = por %p79, %p80
      %p83 = scmp.ne.s32.totalorder %s68, %s82
      %p84 = scmp.eq.s32.totalorder %s23, 0
      %p85 = por %p83, %p84
      %s87 = sadd.s32 %s86, 1
      %p90 = scmp.eq.s32.totalorder %s17, 1
      %p91 = scmp.ne.s32.totalorder %s86, %s88
      %p92 = scmp.eq.s32.totalorder %s17, 0
      %p93 = por %p91, %p92
      %p94 = scmp.ne.s32.totalorder %s86, %s88
      %p95 = scmp.eq.s32.totalorder %s22, 1
      %p96 = por %p94, %p95
      %p97 = scmp.ne.s32.totalorder %s88, %s89
      %p98 = scmp.eq.s32.totalorder %s22, 0
      %p99 = por %p97, %p98
      %p100 = scmp.ne.s32.totalorder %s88, %s89
      %p101 = scmp.eq.s32.totalorder %s23, 1
      %p102 = por %p100, %p101
      %p104 = scmp.ne.s32.totalorder %s89, %s103
      %p105 = scmp.eq.s32.totalorder %s23, 0
      %p106 = por %p104, %p105
      %s108 = sadd.s32 %s107, 1
      %p111 = scmp.eq.s32.totalorder %s17, 1
      %p112 = scmp.ne.s32.totalorder %s107, %s109
      %p113 = scmp.eq.s32.totalorder %s17, 0
      %p114 = por %p112, %p113
      %p115 = scmp.ne.s32.totalorder %s107, %s109
      %p116 = scmp.eq.s32.totalorder %s22, 1
      %p117 = por %p115, %p116
      %p118 = scmp.ne.s32.totalorder %s109, %s110
      %p119 = scmp.eq.s32.totalorder %s22, 0
      %p120 = por %p118, %p119
      %p121 = scmp.ne.s32.totalorder %s109, %s110
      %p122 = scmp.eq.s32.totalorder %s23, 1
      %p123 = por %p121, %p122
      %p125 = scmp.ne.s32.totalorder %s110, %s124
      %p126 = scmp.eq.s32.totalorder %s23, 0
      %p127 = por %p125, %p126
      %s129 = sadd.s32 %s128, 1
      %p132 = scmp.eq.s32.totalorder %s17, 1
      %p133 = scmp.ne.s32.totalorder %s128, %s130
      %p134 = scmp.eq.s32.totalorder %s17, 0
      %p135 = por %p133, %p134
      %p136 = scmp.ne.s32.totalorder %s128, %s130
      %p137 = scmp.eq.s32.totalorder %s22, 1
      %p138 = por %p136, %p137
      %p139 = scmp.ne.s32.totalorder %s130, %s131
      %p140 = scmp.eq.s32.totalorder %s22, 0
      %p141 = por %p139, %p140
      %p142 = scmp.ne.s32.totalorder %s130, %s131
      %p143 = scmp.eq.s32.totalorder %s23, 1
      %p144 = por %p142, %p143
      %p146 = scmp.ne.s32.totalorder %s131, %s145
      %p147 = scmp.eq.s32.totalorder %s23, 0
      %p148 = por %p146, %p147
      %s150 = sadd.s32 %s149, 1
      %p153 = scmp.eq.s32.totalorder %s17, 1
      %p154 = scmp.ne.s32.totalorder %s149, %s151
      %p155 = scmp.eq.s32.totalorder %s17, 0
      %p156 = por %p154, %p155
      %p157 = scmp.ne.s32.totalorder %s149, %s151
      %p158 = scmp.eq.s32.totalorder %s22, 1
      %p159 = por %p157, %p158
      %p160 = scmp.ne.s32.totalorder %s151, %s152
      %p161 = scmp.eq.s32.totalorder %s22, 0
      %p162 = por %p160, %p161
      %p163 = scmp.ne.s32.totalorder %s151, %s152
      %p164 = scmp.eq.s32.totalorder %s23, 1
      %p165 = por %p163, %p164
      %p167 = scmp.ne.s32.totalorder %s152, %s166
      %p168 = scmp.eq.s32.totalorder %s23, 0
      %p169 = por %p167, %p168
      %s171 = sadd.s32 %s170, 1
      %p174 = scmp.eq.s32.totalorder %s17, 1
      %p175 = scmp.ne.s32.totalorder %s170, %s172
      %p176 = scmp.eq.s32.totalorder %s17, 0
      %p177 = por %p175, %p176
      %p178 = scmp.ne.s32.totalorder %s170, %s172
      %p179 = scmp.eq.s32.totalorder %s22, 1
      %p180 = por %p178, %p179
      %p181 = scmp.ne.s32.totalorder %s172, %s173
      %p182 = scmp.eq.s32.totalorder %s22, 0
      %p183 = por %p181, %p182
      %p184 = scmp.ne.s32.totalorder %s172, %s173
      %p185 = scmp.eq.s32.totalorder %s23, 1
      %p186 = por %p184, %p185
      %p188 = scmp.ne.s32.totalorder %s173, %s187
      %p189 = scmp.eq.s32.totalorder %s23, 0
      %p190 = por %p188, %p189
      %s191 = ssub.s32 %s24, %s36
      %p192 = scmp.eq.s32.totalorder %s191, 0
      %s194 = sadd.s32 %s193, 1
      %s195 = scalar_select %p192, %s193, %s194
      %p198 = pneg %p192
      %p199 = scmp.eq.s32.totalorder %s17, 1
      %p200 = por %p198, %p199
      %p201 = scmp.ne.s32.totalorder %s193, %s196
      %p202 = scmp.eq.s32.totalorder %s17, 0
      %p203 = por %p201, %p202
      %p204 = scmp.ne.s32.totalorder %s193, %s196
      %p205 = scmp.eq.s32.totalorder %s22, 1
      %p206 = por %p204, %p205
      %p207 = scmp.ne.s32.totalorder %s196, %s197
      %p208 = scmp.eq.s32.totalorder %s22, 0
      %p209 = por %p207, %p208
      %p210 = scmp.ne.s32.totalorder %s196, %s197
      %p211 = scmp.eq.s32.totalorder %s23, 1
      %p212 = por %p210, %p211
      %p214 = scmp.ne.s32.totalorder %s197, %s213
      %p215 = scmp.eq.s32.totalorder %s23, 0
      %p216 = por %p214, %p215
      %p217 = scmp.le.s32.totalorder 1, %s17
      %p218 = scmp.lt.s32.totalorder %s17, 3
      %p219 = pnand %p217, %p218
      %p220 = pneg %p219
      // Predicated region
      $region9: #{tpu_custom_call.1} parent=5 // pred_check
        _
      $region10: #{tpu_custom_call.1} parent=5 // pred_check_branch
        %222 = sbr.rel (%p219) target = $region12
      $region11: #{tpu_custom_call.1} parent=5 // pred_region
        %s223 = ssub.s32 %s17, 1
        // Predicated region
        $region13: #{tpu_custom_call.1} parent=11 // pred_check
          %p224 = pneg %p78
        $region14: #{tpu_custom_call.1} parent=11 // pred_check_branch
          %226 = sbr.rel (%p224) target = $region16
        $region15: #{tpu_custom_call.1} parent=11 // pred_region
          _
        $region16: #{tpu_custom_call.1} parent=11 // pred_fallthru
          _
        // Predicated region
        $region17: #{tpu_custom_call.1} parent=11 // pred_check
          %p227 = pneg %p99
        $region18: #{tpu_custom_call.1} parent=11 // pred_check_branch
          %229 = sbr.rel (%p227) target = $region20
        $region19: #{tpu_custom_call.1} parent=11 // pred_region
          _
        $region20: #{tpu_custom_call.1} parent=11 // pred_fallthru
          _
        // Predicated region
        $region21: #{tpu_custom_call.1} parent=11 // pred_check
          %p230 = pneg %p120
        $region22: #{tpu_custom_call.1} parent=11 // pred_check_branch
          %232 = sbr.rel (%p230) target = $region24
        $region23: #{tpu_custom_call.1} parent=11 // pred_region
          _
        $region24: #{tpu_custom_call.1} parent=11 // pred_fallthru
          _
        // Predicated region
        $region25: #{tpu_custom_call.1} parent=11 // pred_check
          %p233 = pneg %p141
        $region26: #{tpu_custom_call.1} parent=11 // pred_check_branch
          %235 = sbr.rel (%p233) target = $region28
        $region27: #{tpu_custom_call.1} parent=11 // pred_region
          _
        $region28: #{tpu_custom_call.1} parent=11 // pred_fallthru
          _
        // Predicated region
        $region29: #{tpu_custom_call.1} parent=11 // pred_check
          %p236 = pneg %p162
        $region30: #{tpu_custom_call.1} parent=11 // pred_check_branch
          %238 = sbr.rel (%p236) target = $region32
        $region31: #{tpu_custom_call.1} parent=11 // pred_region
          %s240 = ssub.s32 8192, 8192
          %241 = vsyncadd [#allocation3], %s240
          %s242 = sshll.u32 [#allocation2], 4
          %s243 = int_to_ptr.vmem [resolvable:$true] %s242
          %248 = dma.hbm_to_vmem [thread:$0]  %s5, 8192, %s243, [#allocation3], 512, 512, 32
        $region32: #{tpu_custom_call.1} parent=11 // pred_fallthru
          _
        // Predicated region
        $region33: #{tpu_custom_call.1} parent=11 // pred_check
          %p249 = pneg %p183
        $region34: #{tpu_custom_call.1} parent=11 // pred_check_branch
          %251 = sbr.rel (%p249) target = $region36
        $region35: #{tpu_custom_call.1} parent=11 // pred_region
          _
        $region36: #{tpu_custom_call.1} parent=11 // pred_fallthru
          _
      $region12: #{tpu_custom_call.1} parent=5 // pred_fallthru
        _
      %p252 = scmp.lt.s32.totalorder %s17, 2
      // Predicated region
      $region37: #{tpu_custom_call.1} parent=5 // pred_check
        %p253 = pneg %p252
      $region38: #{tpu_custom_call.1} parent=5 // pred_check_branch
        %255 = sbr.rel (%p253) target = $region40
      $region39: #{tpu_custom_call.1} parent=5 // pred_region
        // Predicated region
        $region41: #{tpu_custom_call.1} parent=39 // pred_check
          %p256 = pneg %p51
        $region42: #{tpu_custom_call.1} parent=39 // pred_check_branch
          %258 = sbr.rel (%p256) target = $region44
        $region43: #{tpu_custom_call.1} parent=39 // pred_region
          %s259 = smul.u32 16, %s25
          %p260 = scmp.lt.s32.totalorder %s24, 1
          %s261 = scalar_select %p260, %s24, 1
          %p262 = scmp.lt.s32.totalorder %s259, 15
          %s263 = scalar_select %p262, %s259, 15
          %s264 = smul.addr %s261, 16
          %s265 = sadd.s32 %s263, %s264
          %s266 = smul.addr %s265, 8
          %s267 = scalar_lea.vmem %s0, %s266
          %s268 = smul.u32 16, %s25
        $region44: #{tpu_custom_call.1} parent=39 // pred_fallthru
          _
      $region40: #{tpu_custom_call.1} parent=5 // pred_fallthru
        _
      %p269 = scmp.le.s32.totalorder 1, %s17
      %p270 = scmp.lt.s32.totalorder %s17, 3
      %p271 = pnand %p269, %p270
      %p272 = pneg %p271
      // Predicated region
      $region45: #{tpu_custom_call.1} parent=5 // pred_check
        _
      $region46: #{tpu_custom_call.1} parent=5 // pred_check_branch
        %274 = sbr.rel (%p271) target = $region48
      $region47: #{tpu_custom_call.1} parent=5 // pred_region
        %s275 = ssub.s32 %s17, 1
        // Predicated region
        $region49: #{tpu_custom_call.1} parent=47 // pred_check
          %p276 = pneg %p162
        $region50: #{tpu_custom_call.1} parent=47 // pred_check_branch
          %278 = sbr.rel (%p276) target = $region52
        $region51: #{tpu_custom_call.1} parent=47 // pred_region
          %279 = dma.done [#allocation3], 8192
        $region52: #{tpu_custom_call.1} parent=47 // pred_fallthru
          _
        %s280 = smul.u32 16, %s27
        %p281 = scmp.lt.s32.totalorder %s26, 1
        %s282 = scalar_select %p281, %s26, 1
        %p283 = scmp.lt.s32.totalorder %s280, 15
        %s284 = scalar_select %p283, %s280, 15
        %s285 = smul.addr %s282, 16
        %s286 = sadd.s32 %s284, %s285
        %s287 = smul.addr %s286, 8
        %s288 = scalar_lea.vmem %s0, %s287
        %p289 = pneg %p57
        %p290 = pneg %p54
        %p291 = pneg %p78
        %p292 = pneg %p75
        %p293 = pneg %p99
        %p294 = pneg %p96
        %p295 = pneg %p120
        %p296 = pneg %p117
        %p297 = pneg %p141
        %p298 = pneg %p138
        %p299 = pneg %p162
        %p300 = pneg %p159
        %p301 = pneg %p183
        %p302 = pneg %p180
        %p303 = pneg %p209
        %p304 = pneg %p206
        %s305 = sand.u32 %s196, 1
        %s306 = scalar_lea.sflag [#allocation4], %s305
        %s307 = sand.u32 %s196, 1
        %s308 = smul.addr %s307, 8
        %s309 = scalar_lea.vmem [#allocation5], %s308
        %s310 = smul.u32 16, %s27
        %p311 = scmp.lt.s32.totalorder %s26, 1
        %s312 = scalar_select %p311, %s26, 1
        %p313 = scmp.lt.s32.totalorder %s310, 15
        %s314 = scalar_select %p313, %s310, 15
        %s315 = smul.addr %s312, 16
        %s316 = sadd.s32 %s314, %s315
        %s317 = smul.addr %s316, 8
        %s318 = scalar_lea.vmem %s0, %s317
        %s319 = smul.u32 16, %s27
        %v321 = vld [vmem:[%s318] sm:$0xff]
        %v322 = vld [vmem:[%s318 + $0x8] sm:$0xff]
        %v323 = vld [vmem:[%s318 + $0x10] sm:$0xff]
        %v324 = vld [vmem:[%s318 + $0x18] sm:$0xff]
        %v325 = vld [vmem:[%s318 + $0x20] sm:$0xff]
        %v326 = vld [vmem:[%s318 + $0x28] sm:$0xff]
        %v327 = vld [vmem:[%s318 + $0x30] sm:$0xff]
        %v328 = vld [vmem:[%s318 + $0x38] sm:$0xff]
        %v329 = vld [vmem:[%s318 + $0x40] sm:$0xff]
        %v330 = vld [vmem:[%s318 + $0x48] sm:$0xff]
        %v331 = vld [vmem:[%s318 + $0x50] sm:$0xff]
        %v332 = vld [vmem:[%s318 + $0x58] sm:$0xff]
        %v333 = vld [vmem:[%s318 + $0x60] sm:$0xff]
        %v334 = vld [vmem:[%s318 + $0x68] sm:$0xff]
        %v335 = vld [vmem:[%s318 + $0x70] sm:$0xff]
        %v336 = vld [vmem:[%s318 + $0x78] sm:$0xff]
        %v337 = vld [vmem:[%s1] sm:$0x7]
        %v338 = vld [vmem:[%s2] sm:$0x1]
        %v340 = vlaneseq
        %v341 = vshrl.u32 %v340, 7
        %v342 = vsub.s32 0, %v341
        %v343 = vrot.slane %v338, %v342
        %vm345 = vcmask 23552
        %v347 = vsel %vm345, %v321, 0
        %v350 = vsel %vm345, %v322, 0
        %v353 = vsel %vm345, %v323, 0
        %v356 = vsel %vm345, %v324, 0
        %v359 = vsel %vm345, %v325, 0
        %v362 = vsel %vm345, %v326, 0
        %v365 = vsel %vm345, %v327, 0
        %v368 = vsel %vm345, %v328, 0
        %v371 = vsel %vm345, %v329, 0
        %v374 = vsel %vm345, %v330, 0
        %v377 = vsel %vm345, %v331, 0
        %v380 = vsel %vm345, %v332, 0
        %v383 = vsel %vm345, %v333, 0
        %v386 = vsel %vm345, %v334, 0
        %v389 = vsel %vm345, %v335, 0
        %v392 = vsel %vm345, %v336, 0
        %vm394 = vcmask 1042432
        %v396 = vsel %vm394, %v337, 0
        %398 = vmatprep.subr.mxu0 0.0
        %399 = vmatpush1.msra.mxu0 0.0
        %400 = vmatprep.subr.mxu0 0.0
        %401 = vmatpush1.msra.mxu0 0.0
        %402 = vmatprep.subr.mxu0 0.0
        %403 = vmatpush1.msra.mxu0 0.0
        %404 = vmatprep.subr.mxu0 0.0
        %405 = vmatpush1.msra.mxu0 0.0
        %406 = vmatprep.subr.mxu0 0.0
        %407 = vmatpush1.msra.mxu0 0.0
        %408 = vmatprep.subr.mxu0 0.0
        %409 = vmatpush1.msra.mxu0 0.0
        %410 = vmatprep.subr.mxu0 0.0
        %411 = vmatpush1.msra.mxu0 0.0
        %412 = vmatprep.subr.mxu0 0.0
        %413 = vmatpush1.msra.mxu0 0.0
        %414 = vmatprep.subr.mxu0 0.0
        %415 = vmatpush1.msra.mxu0 0.0
        %416 = vmatprep.subr.mxu0 0.0
        %417 = vmatpush1.msra.mxu0 0.0
        %418 = vmatprep.subr.mxu0 0.0
        %419 = vmatpush1.msra.mxu0 0.0
        %420 = vmatprep.subr.mxu0 0.0
        %421 = vmatpush1.msra.mxu0 0.0
        %422 = vmatprep.subr.mxu0 0.0
        %423 = vmatpush1.msra.mxu0 0.0
        %424 = vmatprep.subr.mxu0 0.0
        %425 = vmatpush1.msra.mxu0 0.0
        %426 = vmatprep.subr.mxu0 0.0
        %427 = vmatpush1.msra.mxu0 0.0
        %428 = vmatprep.subr.mxu0 0.0
        %429 = vmatpush1.msra.mxu0 %v396
        %430 = vmatprep.subr.mxu0 0.0
        %431 = vmatpush2.msra.mxu0 0.0
        %432 = vmatprep.subr.mxu0 0.0
        %433 = vmatpush2.msra.mxu0 0.0
        %434 = vmatprep.subr.mxu0 0.0
        %435 = vmatpush2.msra.mxu0 0.0
        %436 = vmatprep.subr.mxu0 0.0
        %437 = vmatpush2.msra.mxu0 0.0
        %438 = vmatprep.subr.mxu0 0.0
        %439 = vmatpush2.msra.mxu0 0.0
        %440 = vmatprep.subr.mxu0 0.0
        %441 = vmatpush2.msra.mxu0 0.0
        %442 = vmatprep.subr.mxu0 0.0
        %443 = vmatpush2.msra.mxu0 0.0
        %444 = vmatprep.subr.mxu0 0.0
        %445 = vmatpush2.msra.mxu0 0.0
        %446 = vmatprep.subr.mxu0 0.0
        %447 = vmatpush2.msra.mxu0 0.0
        %448 = vmatprep.subr.mxu0 0.0
        %449 = vmatpush2.msra.mxu0 0.0
        %450 = vmatprep.subr.mxu0 0.0
        %451 = vmatpush2.msra.mxu0 0.0
        %452 = vmatprep.subr.mxu0 0.0
        %453 = vmatpush2.msra.mxu0 0.0
        %454 = vmatprep.subr.mxu0 0.0
        %455 = vmatpush2.msra.mxu0 0.0
        %456 = vmatprep.subr.mxu0 0.0
        %457 = vmatpush2.msra.mxu0 0.0
        %458 = vmatprep.subr.mxu0 0.0
        %459 = vmatpush2.msra.mxu0 0.0
        %460 = vmatprep.subr.mxu0 0.0
        %461 = vmatpush2.msra.mxu0 0.0
        %462 = vmatprep.mubr.f32.mxu0 0.0
        %463 = vmatmul.mubr.f32.gmra.mxu0 %v347
        %v464 = vpop.f32.mrf.mxu0
        %v465 = vadd.f32 %v343, %v464
        %v466 = vpop.f32.mrf.mxu0
        %467 = vmatprep.mubr.f32.mxu0 0.0
        %468 = vmatmul.mubr.f32.gmra.mxu0 %v350
        %v469 = vpop.f32.mrf.mxu0
        %v470 = vadd.f32 %v343, %v469
        %v471 = vpop.f32.mrf.mxu0
        %472 = vmatprep.mubr.f32.mxu0 0.0
        %473 = vmatmul.mubr.f32.gmra.mxu0 %v353
        %v474 = vpop.f32.mrf.mxu0
        %v475 = vadd.f32 %v343, %v474
        %v476 = vpop.f32.mrf.mxu0
        %477 = vmatprep.mubr.f32.mxu0 0.0
        %478 = vmatmul.mubr.f32.gmra.mxu0 %v356
        %v479 = vpop.f32.mrf.mxu0
        %v480 = vadd.f32 %v343, %v479
        %v481 = vpop.f32.mrf.mxu0
        %482 = vmatprep.mubr.f32.mxu0 0.0
        %483 = vmatmul.mubr.f32.gmra.mxu0 %v359
        %v484 = vpop.f32.mrf.mxu0
        %v485 = vadd.f32 %v343, %v484
        %v486 = vpop.f32.mrf.mxu0
        %487 = vmatprep.mubr.f32.mxu0 0.0
        %488 = vmatmul.mubr.f32.gmra.mxu0 %v362
        %v489 = vpop.f32.mrf.mxu0
        %v490 = vadd.f32 %v343, %v489
        %v491 = vpop.f32.mrf.mxu0
        %492 = vmatprep.mubr.f32.mxu0 0.0
        %493 = vmatmul.mubr.f32.gmra.mxu0 %v365
        %v494 = vpop.f32.mrf.mxu0
        %v495 = vadd.f32 %v343, %v494
        %v496 = vpop.f32.mrf.mxu0
        %497 = vmatprep.mubr.f32.mxu0 0.0
        %498 = vmatmul.mubr.f32.gmra.mxu0 %v368
        %v499 = vpop.f32.mrf.mxu0
        %v500 = vadd.f32 %v343, %v499
        %v501 = vpop.f32.mrf.mxu0
        %502 = vmatprep.mubr.f32.mxu0 0.0
        %503 = vmatmul.mubr.f32.gmra.mxu0 %v371
        %v504 = vpop.f32.mrf.mxu0
        %v505 = vadd.f32 %v343, %v504
        %v506 = vpop.f32.mrf.mxu0
        %507 = vmatprep.mubr.f32.mxu0 0.0
        %508 = vmatmul.mubr.f32.gmra.mxu0 %v374
        %v509 = vpop.f32.mrf.mxu0
        %v510 = vadd.f32 %v343, %v509
        %v511 = vpop.f32.mrf.mxu0
        %512 = vmatprep.mubr.f32.mxu0 0.0
        %513 = vmatmul.mubr.f32.gmra.mxu0 %v377
        %v514 = vpop.f32.mrf.mxu0
        %v515 = vadd.f32 %v343, %v514
        %v516 = vpop.f32.mrf.mxu0
        %517 = vmatprep.mubr.f32.mxu0 0.0
        %518 = vmatmul.mubr.f32.gmra.mxu0 %v380
        %v519 = vpop.f32.mrf.mxu0
        %v520 = vadd.f32 %v343, %v519
        %v521 = vpop.f32.mrf.mxu0
        %522 = vmatprep.mubr.f32.mxu0 0.0
        %523 = vmatmul.mubr.f32.gmra.mxu0 %v383
        %v524 = vpop.f32.mrf.mxu0
        %v525 = vadd.f32 %v343, %v524
        %v526 = vpop.f32.mrf.mxu0
        %527 = vmatprep.mubr.f32.mxu0 0.0
        %528 = vmatmul.mubr.f32.gmra.mxu0 %v386
        %v529 = vpop.f32.mrf.mxu0
        %v530 = vadd.f32 %v343, %v529
        %v531 = vpop.f32.mrf.mxu0
        %532 = vmatprep.mubr.f32.mxu0 0.0
        %533 = vmatmul.mubr.f32.gmra.mxu0 %v389
        %v534 = vpop.f32.mrf.mxu0
        %v535 = vadd.f32 %v343, %v534
        %v536 = vpop.f32.mrf.mxu0
        %537 = vmatprep.mubr.f32.mxu0 0.0
        %538 = vmatmul.mubr.f32.gmra.mxu0 %v392
        %v539 = vpop.f32.mrf.mxu0
        %v540 = vadd.f32 %v343, %v539
        %v541 = vpop.f32.mrf.mxu0
        %542 = vdwg.mxu0
        %v543 = vmax.f32 %v465, 0.0
        %v544 = vmax.f32 %v470, 0.0
        %v545 = vmax.f32 %v475, 0.0
        %v546 = vmax.f32 %v480, 0.0
        %v547 = vmax.f32 %v485, 0.0
        %v548 = vmax.f32 %v490, 0.0
        %v549 = vmax.f32 %v495, 0.0
        %v550 = vmax.f32 %v500, 0.0
        %v551 = vmax.f32 %v505, 0.0
        %v552 = vmax.f32 %v510, 0.0
        %v553 = vmax.f32 %v515, 0.0
        %v554 = vmax.f32 %v520, 0.0
        %v555 = vmax.f32 %v525, 0.0
        %v556 = vmax.f32 %v530, 0.0
        %v557 = vmax.f32 %v535, 0.0
        %v558 = vmax.f32 %v540, 0.0
        %v559 = vpack.c.bf16 %v544, %v543
        %v560 = vpack.c.bf16 %v546, %v545
        %v561 = vpack.c.bf16 %v548, %v547
        %v562 = vpack.c.bf16 %v550, %v549
        %v563 = vpack.c.bf16 %v552, %v551
        %v564 = vpack.c.bf16 %v554, %v553
        %v565 = vpack.c.bf16 %v556, %v555
        %v566 = vpack.c.bf16 %v558, %v557
        %v567 = vld [vmem:[%s3] sm:$0xf]
        %v568 = vld [vmem:[%s3 + $0x4] sm:$0xf]
        %v569 = vld [vmem:[%s3 + $0x8] sm:$0xf]
        %v570 = vld [vmem:[%s3 + $0xc] sm:$0xf]
        %v571 = vld [vmem:[%s3 + $0x10] sm:$0xf]
        %v572 = vld [vmem:[%s3 + $0x14] sm:$0xf]
        %v573 = vld [vmem:[%s3 + $0x18] sm:$0xf]
        %v574 = vld [vmem:[%s3 + $0x1c] sm:$0xf]
        %v575 = vld [vmem:[%s4] sm:$0x1]
        %v577 = vlaneseq
        %v578 = vshrl.u32 %v577, 7
        %v579 = vsub.s32 0, %v578
        %v580 = vrot.slane %v575, %v579
        %v590 = vunpack.c.l.b16 %v567
        %v591 = vunpack.c.l.b16 %v568
        %v592 = vunpack.c.l.b16 %v569
        %v593 = vunpack.c.l.b16 %v570
        %v594 = vunpack.c.l.b16 %v571
        %v595 = vunpack.c.l.b16 %v572
        %v596 = vunpack.c.l.b16 %v573
        %v597 = vunpack.c.l.b16 %v574
        %v598 = vpack.c.b16 %v591, %v590
        %v599 = vpack.c.b16 %v593, %v592
        %v600 = vpack.c.b16 %v595, %v594
        %v601 = vpack.c.b16 %v597, %v596
        %vm606 = vcmask 523264
        %v608 = vsel %vm606, %v559, 0
        %v611 = vsel %vm606, %v560, 0
        %v614 = vsel %vm606, %v561, 0
        %v617 = vsel %vm606, %v562, 0
        %v620 = vsel %vm606, %v563, 0
        %v623 = vsel %vm606, %v564, 0
        %v626 = vsel %vm606, %v565, 0
        %v629 = vsel %vm606, %v566, 0
        %631 = vmatprep.subr.bf16.mxu0 0
        %632 = vmatpush1.bf16.msra.mxu0 0
        %633 = vmatprep.subr.bf16.mxu0 0
        %634 = vmatpush1.bf16.msra.mxu0 0
        %635 = vmatprep.subr.bf16.mxu0 0
        %636 = vmatpush1.bf16.msra.mxu0 0
        %637 = vmatprep.subr.bf16.mxu0 0
        %638 = vmatpush1.bf16.msra.mxu0 0
        %639 = vmatprep.subr.bf16.mxu0 0
        %640 = vmatpush1.bf16.msra.mxu0 %v601
        %641 = vmatprep.subr.bf16.mxu0 0
        %642 = vmatpush1.bf16.msra.mxu0 %v600
        %643 = vmatprep.subr.bf16.mxu0 0
        %644 = vmatpush1.bf16.msra.mxu0 %v599
        %645 = vmatprep.subr.bf16.mxu0 0
        %646 = vmatpush1.bf16.msra.mxu0 %v598
        %647 = vmatprep.subr.bf16.mxu0 0
        %648 = vmatpush2.bf16.msra.mxu0 0
        %649 = vmatprep.subr.bf16.mxu0 0
        %650 = vmatpush2.bf16.msra.mxu0 0
        %651 = vmatprep.subr.bf16.mxu0 0
        %652 = vmatpush2.bf16.msra.mxu0 0
        %653 = vmatprep.subr.bf16.mxu0 0
        %654 = vmatpush2.bf16.msra.mxu0 0
        %655 = vmatprep.subr.bf16.mxu0 0
        %656 = vmatpush2.bf16.msra.mxu0 0
        %657 = vmatprep.subr.bf16.mxu0 0
        %658 = vmatpush2.bf16.msra.mxu0 0
        %659 = vmatprep.subr.bf16.mxu0 0
        %660 = vmatpush2.bf16.msra.mxu0 0
        %661 = vmatprep.subr.bf16.mxu0 0
        %662 = vmatpush2.bf16.msra.mxu0 0
        %663 = vmatprep.mubr.bf16.mxu0 0
        %664 = vmatmul.mubr.bf16.gmra.mxu0 %v608
        %v665 = vpop.f32.mrf.mxu0
        %v666 = vadd.f32 %v580, %v665
        %v667 = vpop.f32.mrf.mxu0
        %v668 = vpop.f32.mrf.mxu0
        %v669 = vadd.f32 %v580, %v668
        %v670 = vpop.f32.mrf.mxu0
        %671 = vmatprep.mubr.bf16.mxu0 0
        %672 = vmatmul.mubr.bf16.gmra.mxu0 %v611
        %v673 = vpop.f32.mrf.mxu0
        %v674 = vadd.f32 %v580, %v673
        %v675 = vpop.f32.mrf.mxu0
        %v676 = vpop.f32.mrf.mxu0
        %v677 = vadd.f32 %v580, %v676
        %v678 = vpop.f32.mrf.mxu0
        %679 = vmatprep.mubr.bf16.mxu0 0
        %680 = vmatmul.mubr.bf16.gmra.mxu0 %v614
        %v681 = vpop.f32.mrf.mxu0
        %v682 = vadd.f32 %v580, %v681
        %v683 = vpop.f32.mrf.mxu0
        %v684 = vpop.f32.mrf.mxu0
        %v685 = vadd.f32 %v580, %v684
        %v686 = vpop.f32.mrf.mxu0
        %687 = vmatprep.mubr.bf16.mxu0 0
        %688 = vmatmul.mubr.bf16.gmra.mxu0 %v617
        %v689 = vpop.f32.mrf.mxu0
        %v690 = vadd.f32 %v580, %v689
        %v691 = vpop.f32.mrf.mxu0
        %v692 = vpop.f32.mrf.mxu0
        %v693 = vadd.f32 %v580, %v692
        %v694 = vpop.f32.mrf.mxu0
        %695 = vmatprep.mubr.bf16.mxu0 0
        %696 = vmatmul.mubr.bf16.gmra.mxu0 %v620
        %v697 = vpop.f32.mrf.mxu0
        %v698 = vadd.f32 %v580, %v697
        %v699 = vpop.f32.mrf.mxu0
        %v700 = vpop.f32.mrf.mxu0
        %v701 = vadd.f32 %v580, %v700
        %v702 = vpop.f32.mrf.mxu0
        %703 = vmatprep.mubr.bf16.mxu0 0
        %704 = vmatmul.mubr.bf16.gmra.mxu0 %v623
        %v705 = vpop.f32.mrf.mxu0
        %v706 = vadd.f32 %v580, %v705
        %v707 = vpop.f32.mrf.mxu0
        %v708 = vpop.f32.mrf.mxu0
        %v709 = vadd.f32 %v580, %v708
        %v710 = vpop.f32.mrf.mxu0
        %711 = vmatprep.mubr.bf16.mxu0 0
        %712 = vmatmul.mubr.bf16.gmra.mxu0 %v626
        %v713 = vpop.f32.mrf.mxu0
        %v714 = vadd.f32 %v580, %v713
        %v715 = vpop.f32.mrf.mxu0
        %v716 = vpop.f32.mrf.mxu0
        %v717 = vadd.f32 %v580, %v716
        %v718 = vpop.f32.mrf.mxu0
        %719 = vmatprep.mubr.bf16.mxu0 0
        %720 = vmatmul.mubr.bf16.gmra.mxu0 %v629
        %v721 = vpop.f32.mrf.mxu0
        %v722 = vadd.f32 %v580, %v721
        %v723 = vpop.f32.mrf.mxu0
        %v724 = vpop.f32.mrf.mxu0
        %v725 = vadd.f32 %v580, %v724
        %v726 = vpop.f32.mrf.mxu0
        %727 = vdwg.mxu0
        %v728 = vmax.f32 %v666, 0.0
        %v729 = vmax.f32 %v669, 0.0
        %v730 = vmax.f32 %v674, 0.0
        %v731 = vmax.f32 %v677, 0.0
        %v732 = vmax.f32 %v682, 0.0
        %v733 = vmax.f32 %v685, 0.0
        %v734 = vmax.f32 %v690, 0.0
        %v735 = vmax.f32 %v693, 0.0
        %v736 = vmax.f32 %v698, 0.0
        %v737 = vmax.f32 %v701, 0.0
        %v738 = vmax.f32 %v706, 0.0
        %v739 = vmax.f32 %v709, 0.0
        %v740 = vmax.f32 %v714, 0.0
        %v741 = vmax.f32 %v717, 0.0
        %v742 = vmax.f32 %v722, 0.0
        %v743 = vmax.f32 %v725, 0.0
        %v744 = vpack.c.bf16 %v729, %v728
        %v745 = vpack.c.bf16 %v731, %v730
        %v746 = vpack.c.bf16 %v733, %v732
        %v747 = vpack.c.bf16 %v735, %v734
        %v748 = vpack.c.bf16 %v737, %v736
        %v749 = vpack.c.bf16 %v739, %v738
        %v750 = vpack.c.bf16 %v741, %v740
        %v751 = vpack.c.bf16 %v743, %v742
        %v752 = vld [vmem:[#allocation2] sm:$0xff]
        %v753 = vld [vmem:[#allocation2 + $0x8] sm:$0xff]
        %v754 = vld [vmem:[#allocation2 + $0x10] sm:$0xff]
        %v755 = vld [vmem:[#allocation2 + $0x18] sm:$0xff]
        %v756 = vld [vmem:[#allocation2 + $0x20] sm:$0xff]
        %v757 = vld [vmem:[#allocation2 + $0x28] sm:$0xff]
        %v758 = vld [vmem:[#allocation2 + $0x30] sm:$0xff]
        %v759 = vld [vmem:[#allocation2 + $0x38] sm:$0xff]
        %v760 = vld [vmem:[#allocation2 + $0x40] sm:$0xff]
        %v761 = vld [vmem:[#allocation2 + $0x48] sm:$0xff]
        %v762 = vld [vmem:[#allocation2 + $0x50] sm:$0xff]
        %v763 = vld [vmem:[#allocation2 + $0x58] sm:$0xff]
        %v764 = vld [vmem:[#allocation2 + $0x60] sm:$0xff]
        %v765 = vld [vmem:[#allocation2 + $0x68] sm:$0xff]
        %v766 = vld [vmem:[#allocation2 + $0x70] sm:$0xff]
        %v767 = vld [vmem:[#allocation2 + $0x78] sm:$0xff]
        %v768 = vld [vmem:[#allocation2 + $0x80] sm:$0xff]
        %v769 = vld [vmem:[#allocation2 + $0x88] sm:$0xff]
        %v770 = vld [vmem:[#allocation2 + $0x90] sm:$0xff]
        %v771 = vld [vmem:[#allocation2 + $0x98] sm:$0xff]
        %v772 = vld [vmem:[#allocation2 + $0xa0] sm:$0xff]
        %v773 = vld [vmem:[#allocation2 + $0xa8] sm:$0xff]
        %v774 = vld [vmem:[#allocation2 + $0xb0] sm:$0xff]
        %v775 = vld [vmem:[#allocation2 + $0xb8] sm:$0xff]
        %v776 = vld [vmem:[#allocation2 + $0xc0] sm:$0xff]
        %v777 = vld [vmem:[#allocation2 + $0xc8] sm:$0xff]
        %v778 = vld [vmem:[#allocation2 + $0xd0] sm:$0xff]
        %v779 = vld [vmem:[#allocation2 + $0xd8] sm:$0xff]
        %v780 = vld [vmem:[#allocation2 + $0xe0] sm:$0xff]
        %v781 = vld [vmem:[#allocation2 + $0xe8] sm:$0xff]
        %v782 = vld [vmem:[#allocation2 + $0xf0] sm:$0xff]
        %v783 = vld [vmem:[#allocation2 + $0xf8] sm:$0xff]
        %v784 = vld [vmem:[#allocation2 + $0x100] sm:$0xff]
        %v785 = vld [vmem:[#allocation2 + $0x108] sm:$0xff]
        %v786 = vld [vmem:[#allocation2 + $0x110] sm:$0xff]
        %v787 = vld [vmem:[#allocation2 + $0x118] sm:$0xff]
        %v788 = vld [vmem:[#allocation2 + $0x120] sm:$0xff]
        %v789 = vld [vmem:[#allocation2 + $0x128] sm:$0xff]
        %v790 = vld [vmem:[#allocation2 + $0x130] sm:$0xff]
        %v791 = vld [vmem:[#allocation2 + $0x138] sm:$0xff]
        %v792 = vld [vmem:[#allocation2 + $0x140] sm:$0xff]
        %v793 = vld [vmem:[#allocation2 + $0x148] sm:$0xff]
        %v794 = vld [vmem:[#allocation2 + $0x150] sm:$0xff]
        %v795 = vld [vmem:[#allocation2 + $0x158] sm:$0xff]
        %v796 = vld [vmem:[#allocation2 + $0x160] sm:$0xff]
        %v797 = vld [vmem:[#allocation2 + $0x168] sm:$0xff]
        %v798 = vld [vmem:[#allocation2 + $0x170] sm:$0xff]
        %v799 = vld [vmem:[#allocation2 + $0x178] sm:$0xff]
        %v800 = vld [vmem:[#allocation2 + $0x180] sm:$0xff]
        %v801 = vld [vmem:[#allocation2 + $0x188] sm:$0xff]
        %v802 = vld [vmem:[#allocation2 + $0x190] sm:$0xff]
        %v803 = vld [vmem:[#allocation2 + $0x198] sm:$0xff]
        %v804 = vld [vmem:[#allocation2 + $0x1a0] sm:$0xff]
        %v805 = vld [vmem:[#allocation2 + $0x1a8] sm:$0xff]
        %v806 = vld [vmem:[#allocation2 + $0x1b0] sm:$0xff]
        %v807 = vld [vmem:[#allocation2 + $0x1b8] sm:$0xff]
        %v808 = vld [vmem:[#allocation2 + $0x1c0] sm:$0xff]
        %v809 = vld [vmem:[#allocation2 + $0x1c8] sm:$0xff]
        %v810 = vld [vmem:[#allocation2 + $0x1d0] sm:$0xff]
        %v811 = vld [vmem:[#allocation2 + $0x1d8] sm:$0xff]
        %v812 = vld [vmem:[#allocation2 + $0x1e0] sm:$0xff]
        %v813 = vld [vmem:[#allocation2 + $0x1e8] sm:$0xff]
        %v814 = vld [vmem:[#allocation2 + $0x1f0] sm:$0xff]
        %v815 = vld [vmem:[#allocation2 + $0x1f8] sm:$0xff]
        %v816 = vld [vmem:[%s6] sm:$0xff]
        %v818 = vlaneseq
        %v819 = vshrl.u32 %v818, 7
        %v820 = vsub.s32 0, %v819
        %v821 = vrot.slane %v816, %v820
        %v822 = vlaneseq
        %v823 = vshrl.u32 %v822, 7
        %v824 = vsub.s32 1, %v823
        %v825 = vrot.slane %v816, %v824
        %v826 = vlaneseq
        %v827 = vshrl.u32 %v826, 7
        %v828 = vsub.s32 2, %v827
        %v829 = vrot.slane %v816, %v828
        %v830 = vlaneseq
        %v831 = vshrl.u32 %v830, 7
        %v832 = vsub.s32 3, %v831
        %v833 = vrot.slane %v816, %v832
        %v834 = vlaneseq
        %v835 = vshrl.u32 %v834, 7
        %v836 = vsub.s32 4, %v835
        %v837 = vrot.slane %v816, %v836
        %v838 = vlaneseq
        %v839 = vshrl.u32 %v838, 7
        %v840 = vsub.s32 5, %v839
        %v841 = vrot.slane %v816, %v840
        %v842 = vlaneseq
        %v843 = vshrl.u32 %v842, 7
        %v844 = vsub.s32 6, %v843
        %v845 = vrot.slane %v816, %v844
        %v846 = vlaneseq
        %v847 = vshrl.u32 %v846, 7
        %v848 = vsub.s32 7, %v847
        %v849 = vrot.slane %v816, %v848
        %v922 = vunpack.c.l.b16 %v752
        %v923 = vunpack.c.h.b16 %v752
        %v924 = vunpack.c.l.b16 %v753
        %v925 = vunpack.c.h.b16 %v753
        %v926 = vunpack.c.l.b16 %v754
        %v927 = vunpack.c.h.b16 %v754
        %v928 = vunpack.c.l.b16 %v755
        %v929 = vunpack.c.h.b16 %v755
        %v930 = vunpack.c.l.b16 %v756
        %v931 = vunpack.c.h.b16 %v756
        %v932 = vunpack.c.l.b16 %v757
        %v933 = vunpack.c.h.b16 %v757
        %v934 = vunpack.c.l.b16 %v758
        %v935 = vunpack.c.h.b16 %v758
        %v936 = vunpack.c.l.b16 %v759
        %v937 = vunpack.c.h.b16 %v759
        %v938 = vunpack.c.l.b16 %v760
        %v939 = vunpack.c.h.b16 %v760
        %v940 = vunpack.c.l.b16 %v761
        %v941 = vunpack.c.h.b16 %v761
        %v942 = vunpack.c.l.b16 %v762
        %v943 = vunpack.c.h.b16 %v762
        %v944 = vunpack.c.l.b16 %v763
        %v945 = vunpack.c.h.b16 %v763
        %v946 = vunpack.c.l.b16 %v764
        %v947 = vunpack.c.h.b16 %v764
        %v948 = vunpack.c.l.b16 %v765
        %v949 = vunpack.c.h.b16 %v765
        %v950 = vunpack.c.l.b16 %v766
        %v951 = vunpack.c.h.b16 %v766
        %v952 = vunpack.c.l.b16 %v767
        %v953 = vunpack.c.h.b16 %v767
        %v954 = vunpack.c.l.b16 %v768
        %v955 = vunpack.c.h.b16 %v768
        %v956 = vunpack.c.l.b16 %v769
        %v957 = vunpack.c.h.b16 %v769
        %v958 = vunpack.c.l.b16 %v770
        %v959 = vunpack.c.h.b16 %v770
        %v960 = vunpack.c.l.b16 %v771
        %v961 = vunpack.c.h.b16 %v771
        %v962 = vunpack.c.l.b16 %v772
        %v963 = vunpack.c.h.b16 %v772
        %v964 = vunpack.c.l.b16 %v773
        %v965 = vunpack.c.h.b16 %v773
        %v966 = vunpack.c.l.b16 %v774
        %v967 = vunpack.c.h.b16 %v774
        %v968 = vunpack.c.l.b16 %v775
        %v969 = vunpack.c.h.b16 %v775
        %v970 = vunpack.c.l.b16 %v776
        %v971 = vunpack.c.h.b16 %v776
        %v972 = vunpack.c.l.b16 %v777
        %v973 = vunpack.c.h.b16 %v777
        %v974 = vunpack.c.l.b16 %v778
        %v975 = vunpack.c.h.b16 %v778
        %v976 = vunpack.c.l.b16 %v779
        %v977 = vunpack.c.h.b16 %v779
        %v978 = vunpack.c.l.b16 %v780
        %v979 = vunpack.c.h.b16 %v780
        %v980 = vunpack.c.l.b16 %v781
        %v981 = vunpack.c.h.b16 %v781
        %v982 = vunpack.c.l.b16 %v782
        %v983 = vunpack.c.h.b16 %v782
        %v984 = vunpack.c.l.b16 %v783
        %v985 = vunpack.c.h.b16 %v783
        %v986 = vunpack.c.l.b16 %v784
        %v987 = vunpack.c.h.b16 %v784
        %v988 = vunpack.c.l.b16 %v785
        %v989 = vunpack.c.h.b16 %v785
        %v990 = vunpack.c.l.b16 %v786
        %v991 = vunpack.c.h.b16 %v786
        %v992 = vunpack.c.l.b16 %v787
        %v993 = vunpack.c.h.b16 %v787
        %v994 = vunpack.c.l.b16 %v788
        %v995 = vunpack.c.h.b16 %v788
        %v996 = vunpack.c.l.b16 %v789
        %v997 = vunpack.c.h.b16 %v789
        %v998 = vunpack.c.l.b16 %v790
        %v999 = vunpack.c.h.b16 %v790
        %v1000 = vunpack.c.l.b16 %v791
        %v1001 = vunpack.c.h.b16 %v791
        %v1002 = vunpack.c.l.b16 %v792
        %v1003 = vunpack.c.h.b16 %v792
        %v1004 = vunpack.c.l.b16 %v793
        %v1005 = vunpack.c.h.b16 %v793
        %v1006 = vunpack.c.l.b16 %v794
        %v1007 = vunpack.c.h.b16 %v794
        %v1008 = vunpack.c.l.b16 %v795
        %v1009 = vunpack.c.h.b16 %v795
        %v1010 = vunpack.c.l.b16 %v796
        %v1011 = vunpack.c.h.b16 %v796
        %v1012 = vunpack.c.l.b16 %v797
        %v1013 = vunpack.c.h.b16 %v797
        %v1014 = vunpack.c.l.b16 %v798
        %v1015 = vunpack.c.h.b16 %v798
        %v1016 = vunpack.c.l.b16 %v799
        %v1017 = vunpack.c.h.b16 %v799
        %v1018 = vunpack.c.l.b16 %v800
        %v1019 = vunpack.c.h.b16 %v800
        %v1020 = vunpack.c.l.b16 %v801
        %v1021 = vunpack.c.h.b16 %v801
        %v1022 = vunpack.c.l.b16 %v802
        %v1023 = vunpack.c.h.b16 %v802
        %v1024 = vunpack.c.l.b16 %v803
        %v1025 = vunpack.c.h.b16 %v803
        %v1026 = vunpack.c.l.b16 %v804
        %v1027 = vunpack.c.h.b16 %v804
        %v1028 = vunpack.c.l.b16 %v805
        %v1029 = vunpack.c.h.b16 %v805
        %v1030 = vunpack.c.l.b16 %v806
        %v1031 = vunpack.c.h.b16 %v806
        %v1032 = vunpack.c.l.b16 %v807
        %v1033 = vunpack.c.h.b16 %v807
        %v1034 = vunpack.c.l.b16 %v808
        %v1035 = vunpack.c.h.b16 %v808
        %v1036 = vunpack.c.l.b16 %v809
        %v1037 = vunpack.c.h.b16 %v809
        %v1038 = vunpack.c.l.b16 %v810
        %v1039 = vunpack.c.h.b16 %v810
        %v1040 = vunpack.c.l.b16 %v811
        %v1041 = vunpack.c.h.b16 %v811
        %v1042 = vunpack.c.l.b16 %v812
        %v1043 = vunpack.c.h.b16 %v812
        %v1044 = vunpack.c.l.b16 %v813
        %v1045 = vunpack.c.h.b16 %v813
        %v1046 = vunpack.c.l.b16 %v814
        %v1047 = vunpack.c.h.b16 %v814
        %v1048 = vunpack.c.l.b16 %v815
        %v1049 = vunpack.c.h.b16 %v815
        %v1050 = vpack.c.b16 %v930, %v922
        %v1051 = vpack.c.b16 %v931, %v923
        %v1052 = vpack.c.b16 %v932, %v924
        %v1053 = vpack.c.b16 %v933, %v925
        %v1054 = vpack.c.b16 %v934, %v926
        %v1055 = vpack.c.b16 %v935, %v927
        %v1056 = vpack.c.b16 %v936, %v928
        %v1057 = vpack.c.b16 %v937, %v929
        %v1058 = vpack.c.b16 %v946, %v938
        %v1059 = vpack.c.b16 %v947, %v939
        %v1060 = vpack.c.b16 %v948, %v940
        %v1061 = vpack.c.b16 %v949, %v941
        %v1062 = vpack.c.b16 %v950, %v942
        %v1063 = vpack.c.b16 %v951, %v943
        %v1064 = vpack.c.b16 %v952, %v944
        %v1065 = vpack.c.b16 %v953, %v945
        %v1066 = vpack.c.b16 %v962, %v954
        %v1067 = vpack.c.b16 %v963, %v955
        %v1068 = vpack.c.b16 %v964, %v956
        %v1069 = vpack.c.b16 %v965, %v957
        %v1070 = vpack.c.b16 %v966, %v958
        %v1071 = vpack.c.b16 %v967, %v959
        %v1072 = vpack.c.b16 %v968, %v960
        %v1073 = vpack.c.b16 %v969, %v961
        %v1074 = vpack.c.b16 %v978, %v970
        %v1075 = vpack.c.b16 %v979, %v971
        %v1076 = vpack.c.b16 %v980, %v972
        %v1077 = vpack.c.b16 %v981, %v973
        %v1078 = vpack.c.b16 %v982, %v974
        %v1079 = vpack.c.b16 %v983, %v975
        %v1080 = vpack.c.b16 %v984, %v976
        %v1081 = vpack.c.b16 %v985, %v977
        %v1082 = vpack.c.b16 %v994, %v986
        %v1083 = vpack.c.b16 %v995, %v987
        %v1084 = vpack.c.b16 %v996, %v988
        %v1085 = vpack.c.b16 %v997, %v989
        %v1086 = vpack.c.b16 %v998, %v990
        %v1087 = vpack.c.b16 %v999, %v991
        %v1088 = vpack.c.b16 %v1000, %v992
        %v1089 = vpack.c.b16 %v1001, %v993
        %v1090 = vpack.c.b16 %v1010, %v1002
        %v1091 = vpack.c.b16 %v1011, %v1003
        %v1092 = vpack.c.b16 %v1012, %v1004
        %v1093 = vpack.c.b16 %v1013, %v1005
        %v1094 = vpack.c.b16 %v1014, %v1006
        %v1095 = vpack.c.b16 %v1015, %v1007
        %v1096 = vpack.c.b16 %v1016, %v1008
        %v1097 = vpack.c.b16 %v1017, %v1009
        %v1098 = vpack.c.b16 %v1026, %v1018
        %v1099 = vpack.c.b16 %v1027, %v1019
        %v1100 = vpack.c.b16 %v1028, %v1020
        %v1101 = vpack.c.b16 %v1029, %v1021
        %v1102 = vpack.c.b16 %v1030, %v1022
        %v1103 = vpack.c.b16 %v1031, %v1023
        %v1104 = vpack.c.b16 %v1032, %v1024
        %v1105 = vpack.c.b16 %v1033, %v1025
        %v1106 = vpack.c.b16 %v1042, %v1034
        %v1107 = vpack.c.b16 %v1043, %v1035
        %v1108 = vpack.c.b16 %v1044, %v1036
        %v1109 = vpack.c.b16 %v1045, %v1037
        %v1110 = vpack.c.b16 %v1046, %v1038
        %v1111 = vpack.c.b16 %v1047, %v1039
        %v1112 = vpack.c.b16 %v1048, %v1040
        %v1113 = vpack.c.b16 %v1049, %v1041
        %1178 = vmatprep.subr.bf16.mxu0 %v1107
        %1179 = vmatpush1.bf16.msra.mxu0 %v1106
        %1180 = vmatprep.subr.bf16.mxu0 %v1099
        %1181 = vmatpush1.bf16.msra.mxu0 %v1098
        %1182 = vmatprep.subr.bf16.mxu0 %v1091
        %1183 = vmatpush1.bf16.msra.mxu0 %v1090
        %1184 = vmatprep.subr.bf16.mxu0 %v1083
        %1185 = vmatpush1.bf16.msra.mxu0 %v1082
        %1186 = vmatprep.subr.bf16.mxu0 %v1075
        %1187 = vmatpush1.bf16.msra.mxu0 %v1074
        %1188 = vmatprep.subr.bf16.mxu0 %v1067
        %1189 = vmatpush1.bf16.msra.mxu0 %v1066
        %1190 = vmatprep.subr.bf16.mxu0 %v1059
        %1191 = vmatpush1.bf16.msra.mxu0 %v1058
        %1192 = vmatprep.subr.bf16.mxu0 %v1051
        %1193 = vmatpush1.bf16.msra.mxu0 %v1050
        %1194 = vmatprep.subr.bf16.mxu0 0
        %1195 = vmatpush2.bf16.msra.mxu0 0
        %1196 = vmatprep.subr.bf16.mxu0 0
        %1197 = vmatpush2.bf16.msra.mxu0 0
        %1198 = vmatprep.subr.bf16.mxu0 0
        %1199 = vmatpush2.bf16.msra.mxu0 0
        %1200 = vmatprep.subr.bf16.mxu0 0
        %1201 = vmatpush2.bf16.msra.mxu0 0
        %1202 = vmatprep.subr.bf16.mxu0 0
        %1203 = vmatpush2.bf16.msra.mxu0 0
        %1204 = vmatprep.subr.bf16.mxu0 0
        %1205 = vmatpush2.bf16.msra.mxu0 0
        %1206 = vmatprep.subr.bf16.mxu0 0
        %1207 = vmatpush2.bf16.msra.mxu0 0
        %1208 = vmatprep.subr.bf16.mxu0 0
        %1209 = vmatpush2.bf16.msra.mxu0 0
        %1210 = vmatprep.mubr.bf16.mxu0 0
        %1211 = vmatmul.mubr.bf16.gmra.mxu0 %v744
        %v1212 = vpop.f32.mrf.mxu0
        %v1213 = vadd.f32 %v821, %v1212
        %v1214 = vpop.f32.mrf.mxu0
        %v1215 = vadd.f32 %v825, %v1214
        %v1216 = vpop.f32.mrf.mxu0
        %v1217 = vadd.f32 %v821, %v1216
        %v1218 = vpop.f32.mrf.mxu0
        %v1219 = vadd.f32 %v825, %v1218
        %1220 = vmatprep.mubr.bf16.mxu0 0
        %1221 = vmatmul.mubr.bf16.gmra.mxu0 %v745
        %v1222 = vpop.f32.mrf.mxu0
        %v1223 = vadd.f32 %v821, %v1222
        %v1224 = vpop.f32.mrf.mxu0
        %v1225 = vadd.f32 %v825, %v1224
        %v1226 = vpop.f32.mrf.mxu0
        %v1227 = vadd.f32 %v821, %v1226
        %v1228 = vpop.f32.mrf.mxu0
        %v1229 = vadd.f32 %v825, %v1228
        %1230 = vmatprep.mubr.bf16.mxu0 0
        %1231 = vmatmul.mubr.bf16.gmra.mxu0 %v746
        %v1232 = vpop.f32.mrf.mxu0
        %v1233 = vadd.f32 %v821, %v1232
        %v1234 = vpop.f32.mrf.mxu0
        %v1235 = vadd.f32 %v825, %v1234
        %v1236 = vpop.f32.mrf.mxu0
        %v1237 = vadd.f32 %v821, %v1236
        %v1238 = vpop.f32.mrf.mxu0
        %v1239 = vadd.f32 %v825, %v1238
        %1240 = vmatprep.mubr.bf16.mxu0 0
        %1241 = vmatmul.mubr.bf16.gmra.mxu0 %v747
        %v1242 = vpop.f32.mrf.mxu0
        %v1243 = vadd.f32 %v821, %v1242
        %v1244 = vpop.f32.mrf.mxu0
        %v1245 = vadd.f32 %v825, %v1244
        %v1246 = vpop.f32.mrf.mxu0
        %v1247 = vadd.f32 %v821, %v1246
        %v1248 = vpop.f32.mrf.mxu0
        %v1249 = vadd.f32 %v825, %v1248
        %1250 = vmatprep.mubr.bf16.mxu0 0
        %1251 = vmatmul.mubr.bf16.gmra.mxu0 %v748
        %v1252 = vpop.f32.mrf.mxu0
        %v1253 = vadd.f32 %v821, %v1252
        %v1254 = vpop.f32.mrf.mxu0
        %v1255 = vadd.f32 %v825, %v1254
        %v1256 = vpop.f32.mrf.mxu0
        %v1257 = vadd.f32 %v821, %v1256
        %v1258 = vpop.f32.mrf.mxu0
        %v1259 = vadd.f32 %v825, %v1258
        %1260 = vmatprep.mubr.bf16.mxu0 0
        %1261 = vmatmul.mubr.bf16.gmra.mxu0 %v749
        %v1262 = vpop.f32.mrf.mxu0
        %v1263 = vadd.f32 %v821, %v1262
        %v1264 = vpop.f32.mrf.mxu0
        %v1265 = vadd.f32 %v825, %v1264
        %v1266 = vpop.f32.mrf.mxu0
        %v1267 = vadd.f32 %v821, %v1266
        %v1268 = vpop.f32.mrf.mxu0
        %v1269 = vadd.f32 %v825, %v1268
        %1270 = vmatprep.mubr.bf16.mxu0 0
        %1271 = vmatmul.mubr.bf16.gmra.mxu0 %v750
        %v1272 = vpop.f32.mrf.mxu0
        %v1273 = vadd.f32 %v821, %v1272
        %v1274 = vpop.f32.mrf.mxu0
        %v1275 = vadd.f32 %v825, %v1274
        %v1276 = vpop.f32.mrf.mxu0
        %v1277 = vadd.f32 %v821, %v1276
        %v1278 = vpop.f32.mrf.mxu0
        %v1279 = vadd.f32 %v825, %v1278
        %1280 = vmatprep.mubr.bf16.mxu0 0
        %1281 = vmatmul.mubr.bf16.gmra.mxu0 %v751
        %v1282 = vpop.f32.mrf.mxu0
        %v1283 = vadd.f32 %v821, %v1282
        %v1284 = vpop.f32.mrf.mxu0
        %v1285 = vadd.f32 %v825, %v1284
        %v1286 = vpop.f32.mrf.mxu0
        %v1287 = vadd.f32 %v821, %v1286
        %v1288 = vpop.f32.mrf.mxu0
        %v1289 = vadd.f32 %v825, %v1288
        %1290 = vdwg.mxu0
        %1291 = vmatprep.subr.bf16.mxu0 %v1109
        %1292 = vmatpush1.bf16.msra.mxu0 %v1108
        %1293 = vmatprep.subr.bf16.mxu0 %v1101
        %1294 = vmatpush1.bf16.msra.mxu0 %v1100
        %1295 = vmatprep.subr.bf16.mxu0 %v1093
        %1296 = vmatpush1.bf16.msra.mxu0 %v1092
        %1297 = vmatprep.subr.bf16.mxu0 %v1085
        %1298 = vmatpush1.bf16.msra.mxu0 %v1084
        %1299 = vmatprep.subr.bf16.mxu0 %v1077
        %1300 = vmatpush1.bf16.msra.mxu0 %v1076
        %1301 = vmatprep.subr.bf16.mxu0 %v1069
        %1302 = vmatpush1.bf16.msra.mxu0 %v1068
        %1303 = vmatprep.subr.bf16.mxu0 %v1061
        %1304 = vmatpush1.bf16.msra.mxu0 %v1060
        %1305 = vmatprep.subr.bf16.mxu0 %v1053
        %1306 = vmatpush1.bf16.msra.mxu0 %v1052
        %1307 = vmatprep.subr.bf16.mxu0 0
        %1308 = vmatpush2.bf16.msra.mxu0 0
        %1309 = vmatprep.subr.bf16.mxu0 0
        %1310 = vmatpush2.bf16.msra.mxu0 0
        %1311 = vmatprep.subr.bf16.mxu0 0
        %1312 = vmatpush2.bf16.msra.mxu0 0
        %1313 = vmatprep.subr.bf16.mxu0 0
        %1314 = vmatpush2.bf16.msra.mxu0 0
        %1315 = vmatprep.subr.bf16.mxu0 0
        %1316 = vmatpush2.bf16.msra.mxu0 0
        %1317 = vmatprep.subr.bf16.mxu0 0
        %1318 = vmatpush2.bf16.msra.mxu0 0
        %1319 = vmatprep.subr.bf16.mxu0 0
        %1320 = vmatpush2.bf16.msra.mxu0 0
        %1321 = vmatprep.subr.bf16.mxu0 0
        %1322 = vmatpush2.bf16.msra.mxu0 0
        %1323 = vmatprep.mubr.bf16.mxu0 0
        %1324 = vmatmul.mubr.bf16.gmra.mxu0 %v744
        %v1325 = vpop.f32.mrf.mxu0
        %v1326 = vadd.f32 %v829, %v1325
        %v1327 = vpop.f32.mrf.mxu0
        %v1328 = vadd.f32 %v833, %v1327
        %v1329 = vpop.f32.mrf.mxu0
        %v1330 = vadd.f32 %v829, %v1329
        %v1331 = vpop.f32.mrf.mxu0
        %v1332 = vadd.f32 %v833, %v1331
        %1333 = vmatprep.mubr.bf16.mxu0 0
        %1334 = vmatmul.mubr.bf16.gmra.mxu0 %v745
        %v1335 = vpop.f32.mrf.mxu0
        %v1336 = vadd.f32 %v829, %v1335
        %v1337 = vpop.f32.mrf.mxu0
        %v1338 = vadd.f32 %v833, %v1337
        %v1339 = vpop.f32.mrf.mxu0
        %v1340 = vadd.f32 %v829, %v1339
        %v1341 = vpop.f32.mrf.mxu0
        %v1342 = vadd.f32 %v833, %v1341
        %1343 = vmatprep.mubr.bf16.mxu0 0
        %1344 = vmatmul.mubr.bf16.gmra.mxu0 %v746
        %v1345 = vpop.f32.mrf.mxu0
        %v1346 = vadd.f32 %v829, %v1345
        %v1347 = vpop.f32.mrf.mxu0
        %v1348 = vadd.f32 %v833, %v1347
        %v1349 = vpop.f32.mrf.mxu0
        %v1350 = vadd.f32 %v829, %v1349
        %v1351 = vpop.f32.mrf.mxu0
        %v1352 = vadd.f32 %v833, %v1351
        %1353 = vmatprep.mubr.bf16.mxu0 0
        %1354 = vmatmul.mubr.bf16.gmra.mxu0 %v747
        %v1355 = vpop.f32.mrf.mxu0
        %v1356 = vadd.f32 %v829, %v1355
        %v1357 = vpop.f32.mrf.mxu0
        %v1358 = vadd.f32 %v833, %v1357
        %v1359 = vpop.f32.mrf.mxu0
        %v1360 = vadd.f32 %v829, %v1359
        %v1361 = vpop.f32.mrf.mxu0
        %v1362 = vadd.f32 %v833, %v1361
        %1363 = vmatprep.mubr.bf16.mxu0 0
        %1364 = vmatmul.mubr.bf16.gmra.mxu0 %v748
        %v1365 = vpop.f32.mrf.mxu0
        %v1366 = vadd.f32 %v829, %v1365
        %v1367 = vpop.f32.mrf.mxu0
        %v1368 = vadd.f32 %v833, %v1367
        %v1369 = vpop.f32.mrf.mxu0
        %v1370 = vadd.f32 %v829, %v1369
        %v1371 = vpop.f32.mrf.mxu0
        %v1372 = vadd.f32 %v833, %v1371
        %1373 = vmatprep.mubr.bf16.mxu0 0
        %1374 = vmatmul.mubr.bf16.gmra.mxu0 %v749
        %v1375 = vpop.f32.mrf.mxu0
        %v1376 = vadd.f32 %v829, %v1375
        %v1377 = vpop.f32.mrf.mxu0
        %v1378 = vadd.f32 %v833, %v1377
        %v1379 = vpop.f32.mrf.mxu0
        %v1380 = vadd.f32 %v829, %v1379
        %v1381 = vpop.f32.mrf.mxu0
        %v1382 = vadd.f32 %v833, %v1381
        %1383 = vmatprep.mubr.bf16.mxu0 0
        %1384 = vmatmul.mubr.bf16.gmra.mxu0 %v750
        %v1385 = vpop.f32.mrf.mxu0
        %v1386 = vadd.f32 %v829, %v1385
        %v1387 = vpop.f32.mrf.mxu0
        %v1388 = vadd.f32 %v833, %v1387
        %v1389 = vpop.f32.mrf.mxu0
        %v1390 = vadd.f32 %v829, %v1389
        %v1391 = vpop.f32.mrf.mxu0
        %v1392 = vadd.f32 %v833, %v1391
        %1393 = vmatprep.mubr.bf16.mxu0 0
        %1394 = vmatmul.mubr.bf16.gmra.mxu0 %v751
        %v1395 = vpop.f32.mrf.mxu0
        %v1396 = vadd.f32 %v829, %v1395
        %v1397 = vpop.f32.mrf.mxu0
        %v1398 = vadd.f32 %v833, %v1397
        %v1399 = vpop.f32.mrf.mxu0
        %v1400 = vadd.f32 %v829, %v1399
        %v1401 = vpop.f32.mrf.mxu0
        %v1402 = vadd.f32 %v833, %v1401
        %1403 = vdwg.mxu0
        %1404 = vmatprep.subr.bf16.mxu0 %v1111
        %1405 = vmatpush1.bf16.msra.mxu0 %v1110
        %1406 = vmatprep.subr.bf16.mxu0 %v1103
        %1407 = vmatpush1.bf16.msra.mxu0 %v1102
        %1408 = vmatprep.subr.bf16.mxu0 %v1095
        %1409 = vmatpush1.bf16.msra.mxu0 %v1094
        %1410 = vmatprep.subr.bf16.mxu0 %v1087
        %1411 = vmatpush1.bf16.msra.mxu0 %v1086
        %1412 = vmatprep.subr.bf16.mxu0 %v1079
        %1413 = vmatpush1.bf16.msra.mxu0 %v1078
        %1414 = vmatprep.subr.bf16.mxu0 %v1071
        %1415 = vmatpush1.bf16.msra.mxu0 %v1070
        %1416 = vmatprep.subr.bf16.mxu0 %v1063
        %1417 = vmatpush1.bf16.msra.mxu0 %v1062
        %1418 = vmatprep.subr.bf16.mxu0 %v1055
        %1419 = vmatpush1.bf16.msra.mxu0 %v1054
        %1420 = vmatprep.subr.bf16.mxu0 0
        %1421 = vmatpush2.bf16.msra.mxu0 0
        %1422 = vmatprep.subr.bf16.mxu0 0
        %1423 = vmatpush2.bf16.msra.mxu0 0
        %1424 = vmatprep.subr.bf16.mxu0 0
        %1425 = vmatpush2.bf16.msra.mxu0 0
        %1426 = vmatprep.subr.bf16.mxu0 0
        %1427 = vmatpush2.bf16.msra.mxu0 0
        %1428 = vmatprep.subr.bf16.mxu0 0
        %1429 = vmatpush2.bf16.msra.mxu0 0
        %1430 = vmatprep.subr.bf16.mxu0 0
        %1431 = vmatpush2.bf16.msra.mxu0 0
        %1432 = vmatprep.subr.bf16.mxu0 0
        %1433 = vmatpush2.bf16.msra.mxu0 0
        %1434 = vmatprep.subr.bf16.mxu0 0
        %1435 = vmatpush2.bf16.msra.mxu0 0
        %1436 = vmatprep.mubr.bf16.mxu0 0
        %1437 = vmatmul.mubr.bf16.gmra.mxu0 %v744
        %v1438 = vpop.f32.mrf.mxu0
        %v1439 = vadd.f32 %v837, %v1438
        %v1440 = vpop.f32.mrf.mxu0
        %v1441 = vadd.f32 %v841, %v1440
        %v1442 = vpop.f32.mrf.mxu0
        %v1443 = vadd.f32 %v837, %v1442
        %v1444 = vpop.f32.mrf.mxu0
        %v1445 = vadd.f32 %v841, %v1444
        %1446 = vmatprep.mubr.bf16.mxu0 0
        %1447 = vmatmul.mubr.bf16.gmra.mxu0 %v745
        %v1448 = vpop.f32.mrf.mxu0
        %v1449 = vadd.f32 %v837, %v1448
        %v1450 = vpop.f32.mrf.mxu0
        %v1451 = vadd.f32 %v841, %v1450
        %v1452 = vpop.f32.mrf.mxu0
        %v1453 = vadd.f32 %v837, %v1452
        %v1454 = vpop.f32.mrf.mxu0
        %v1455 = vadd.f32 %v841, %v1454
        %1456 = vmatprep.mubr.bf16.mxu0 0
        %1457 = vmatmul.mubr.bf16.gmra.mxu0 %v746
        %v1458 = vpop.f32.mrf.mxu0
        %v1459 = vadd.f32 %v837, %v1458
        %v1460 = vpop.f32.mrf.mxu0
        %v1461 = vadd.f32 %v841, %v1460
        %v1462 = vpop.f32.mrf.mxu0
        %v1463 = vadd.f32 %v837, %v1462
        %v1464 = vpop.f32.mrf.mxu0
        %v1465 = vadd.f32 %v841, %v1464
        %1466 = vmatprep.mubr.bf16.mxu0 0
        %1467 = vmatmul.mubr.bf16.gmra.mxu0 %v747
        %v1468 = vpop.f32.mrf.mxu0
        %v1469 = vadd.f32 %v837, %v1468
        %v1470 = vpop.f32.mrf.mxu0
        %v1471 = vadd.f32 %v841, %v1470
        %v1472 = vpop.f32.mrf.mxu0
        %v1473 = vadd.f32 %v837, %v1472
        %v1474 = vpop.f32.mrf.mxu0
        %v1475 = vadd.f32 %v841, %v1474
        %1476 = vmatprep.mubr.bf16.mxu0 0
        %1477 = vmatmul.mubr.bf16.gmra.mxu0 %v748
        %v1478 = vpop.f32.mrf.mxu0
        %v1479 = vadd.f32 %v837, %v1478
        %v1480 = vpop.f32.mrf.mxu0
        %v1481 = vadd.f32 %v841, %v1480
        %v1482 = vpop.f32.mrf.mxu0
        %v1483 = vadd.f32 %v837, %v1482
        %v1484 = vpop.f32.mrf.mxu0
        %v1485 = vadd.f32 %v841, %v1484
        %1486 = vmatprep.mubr.bf16.mxu0 0
        %1487 = vmatmul.mubr.bf16.gmra.mxu0 %v749
        %v1488 = vpop.f32.mrf.mxu0
        %v1489 = vadd.f32 %v837, %v1488
        %v1490 = vpop.f32.mrf.mxu0
        %v1491 = vadd.f32 %v841, %v1490
        %v1492 = vpop.f32.mrf.mxu0
        %v1493 = vadd.f32 %v837, %v1492
        %v1494 = vpop.f32.mrf.mxu0
        %v1495 = vadd.f32 %v841, %v1494
        %1496 = vmatprep.mubr.bf16.mxu0 0
        %1497 = vmatmul.mubr.bf16.gmra.mxu0 %v750
        %v1498 = vpop.f32.mrf.mxu0
        %v1499 = vadd.f32 %v837, %v1498
        %v1500 = vpop.f32.mrf.mxu0
        %v1501 = vadd.f32 %v841, %v1500
        %v1502 = vpop.f32.mrf.mxu0
        %v1503 = vadd.f32 %v837, %v1502
        %v1504 = vpop.f32.mrf.mxu0
        %v1505 = vadd.f32 %v841, %v1504
        %1506 = vmatprep.mubr.bf16.mxu0 0
        %1507 = vmatmul.mubr.bf16.gmra.mxu0 %v751
        %v1508 = vpop.f32.mrf.mxu0
        %v1509 = vadd.f32 %v837, %v1508
        %v1510 = vpop.f32.mrf.mxu0
        %v1511 = vadd.f32 %v841, %v1510
        %v1512 = vpop.f32.mrf.mxu0
        %v1513 = vadd.f32 %v837, %v1512
        %v1514 = vpop.f32.mrf.mxu0
        %v1515 = vadd.f32 %v841, %v1514
        %1516 = vdwg.mxu0
        %1517 = vmatprep.subr.bf16.mxu0 %v1113
        %1518 = vmatpush1.bf16.msra.mxu0 %v1112
        %1519 = vmatprep.subr.bf16.mxu0 %v1105
        %1520 = vmatpush1.bf16.msra.mxu0 %v1104
        %1521 = vmatprep.subr.bf16.mxu0 %v1097
        %1522 = vmatpush1.bf16.msra.mxu0 %v1096
        %1523 = vmatprep.subr.bf16.mxu0 %v1089
        %1524 = vmatpush1.bf16.msra.mxu0 %v1088
        %1525 = vmatprep.subr.bf16.mxu0 %v1081
        %1526 = vmatpush1.bf16.msra.mxu0 %v1080
        %1527 = vmatprep.subr.bf16.mxu0 %v1073
        %1528 = vmatpush1.bf16.msra.mxu0 %v1072
        %1529 = vmatprep.subr.bf16.mxu0 %v1065
        %1530 = vmatpush1.bf16.msra.mxu0 %v1064
        %1531 = vmatprep.subr.bf16.mxu0 %v1057
        %1532 = vmatpush1.bf16.msra.mxu0 %v1056
        %1533 = vmatprep.subr.bf16.mxu0 0
        %1534 = vmatpush2.bf16.msra.mxu0 0
        %1535 = vmatprep.subr.bf16.mxu0 0
        %1536 = vmatpush2.bf16.msra.mxu0 0
        %1537 = vmatprep.subr.bf16.mxu0 0
        %1538 = vmatpush2.bf16.msra.mxu0 0
        %1539 = vmatprep.subr.bf16.mxu0 0
        %1540 = vmatpush2.bf16.msra.mxu0 0
        %1541 = vmatprep.subr.bf16.mxu0 0
        %1542 = vmatpush2.bf16.msra.mxu0 0
        %1543 = vmatprep.subr.bf16.mxu0 0
        %1544 = vmatpush2.bf16.msra.mxu0 0
        %1545 = vmatprep.subr.bf16.mxu0 0
        %1546 = vmatpush2.bf16.msra.mxu0 0
        %1547 = vmatprep.subr.bf16.mxu0 0
        %1548 = vmatpush2.bf16.msra.mxu0 0
        %1549 = vmatprep.mubr.bf16.mxu0 0
        %1550 = vmatmul.mubr.bf16.gmra.mxu0 %v744
        %v1551 = vpop.f32.mrf.mxu0
        %v1552 = vadd.f32 %v845, %v1551
        %v1553 = vpop.f32.mrf.mxu0
        %v1554 = vadd.f32 %v849, %v1553
        %v1555 = vpop.f32.mrf.mxu0
        %v1556 = vadd.f32 %v845, %v1555
        %v1557 = vpop.f32.mrf.mxu0
        %v1558 = vadd.f32 %v849, %v1557
        %1559 = vmatprep.mubr.bf16.mxu0 0
        %1560 = vmatmul.mubr.bf16.gmra.mxu0 %v745
        %v1561 = vpop.f32.mrf.mxu0
        %v1562 = vadd.f32 %v845, %v1561
        %v1563 = vpop.f32.mrf.mxu0
        %v1564 = vadd.f32 %v849, %v1563
        %v1565 = vpop.f32.mrf.mxu0
        %v1566 = vadd.f32 %v845, %v1565
        %v1567 = vpop.f32.mrf.mxu0
        %v1568 = vadd.f32 %v849, %v1567
        %1569 = vmatprep.mubr.bf16.mxu0 0
        %1570 = vmatmul.mubr.bf16.gmra.mxu0 %v746
        %v1571 = vpop.f32.mrf.mxu0
        %v1572 = vadd.f32 %v845, %v1571
        %v1573 = vpop.f32.mrf.mxu0
        %v1574 = vadd.f32 %v849, %v1573
        %v1575 = vpop.f32.mrf.mxu0
        %v1576 = vadd.f32 %v845, %v1575
        %v1577 = vpop.f32.mrf.mxu0
        %v1578 = vadd.f32 %v849, %v1577
        %1579 = vmatprep.mubr.bf16.mxu0 0
        %1580 = vmatmul.mubr.bf16.gmra.mxu0 %v747
        %v1581 = vpop.f32.mrf.mxu0
        %v1582 = vadd.f32 %v845, %v1581
        %v1583 = vpop.f32.mrf.mxu0
        %v1584 = vadd.f32 %v849, %v1583
        %v1585 = vpop.f32.mrf.mxu0
        %v1586 = vadd.f32 %v845, %v1585
        %v1587 = vpop.f32.mrf.mxu0
        %v1588 = vadd.f32 %v849, %v1587
        %1589 = vmatprep.mubr.bf16.mxu0 0
        %1590 = vmatmul.mubr.bf16.gmra.mxu0 %v748
        %v1591 = vpop.f32.mrf.mxu0
        %v1592 = vadd.f32 %v845, %v1591
        %v1593 = vpop.f32.mrf.mxu0
        %v1594 = vadd.f32 %v849, %v1593
        %v1595 = vpop.f32.mrf.mxu0
        %v1596 = vadd.f32 %v845, %v1595
        %v1597 = vpop.f32.mrf.mxu0
        %v1598 = vadd.f32 %v849, %v1597
        %1599 = vmatprep.mubr.bf16.mxu0 0
        %1600 = vmatmul.mubr.bf16.gmra.mxu0 %v749
        %v1601 = vpop.f32.mrf.mxu0
        %v1602 = vadd.f32 %v845, %v1601
        %v1603 = vpop.f32.mrf.mxu0
        %v1604 = vadd.f32 %v849, %v1603
        %v1605 = vpop.f32.mrf.mxu0
        %v1606 = vadd.f32 %v845, %v1605
        %v1607 = vpop.f32.mrf.mxu0
        %v1608 = vadd.f32 %v849, %v1607
        %1609 = vmatprep.mubr.bf16.mxu0 0
        %1610 = vmatmul.mubr.bf16.gmra.mxu0 %v750
        %v1611 = vpop.f32.mrf.mxu0
        %v1612 = vadd.f32 %v845, %v1611
        %v1613 = vpop.f32.mrf.mxu0
        %v1614 = vadd.f32 %v849, %v1613
        %v1615 = vpop.f32.mrf.mxu0
        %v1616 = vadd.f32 %v845, %v1615
        %v1617 = vpop.f32.mrf.mxu0
        %v1618 = vadd.f32 %v849, %v1617
        %1619 = vmatprep.mubr.bf16.mxu0 0
        %1620 = vmatmul.mubr.bf16.gmra.mxu0 %v751
        %v1621 = vpop.f32.mrf.mxu0
        %v1622 = vadd.f32 %v845, %v1621
        %v1623 = vpop.f32.mrf.mxu0
        %v1624 = vadd.f32 %v849, %v1623
        %v1625 = vpop.f32.mrf.mxu0
        %v1626 = vadd.f32 %v845, %v1625
        %v1627 = vpop.f32.mrf.mxu0
        %v1628 = vadd.f32 %v849, %v1627
        %1629 = vdwg.mxu0
        %v1630 = vmax.f32 %v1213, 0.0
        %v1631 = vmax.f32 %v1215, 0.0
        %v1632 = vmax.f32 %v1326, 0.0
        %v1633 = vmax.f32 %v1328, 0.0
        %v1634 = vmax.f32 %v1439, 0.0
        %v1635 = vmax.f32 %v1441, 0.0
        %v1636 = vmax.f32 %v1552, 0.0
        %v1637 = vmax.f32 %v1554, 0.0
        %v1638 = vmax.f32 %v1217, 0.0
        %v1639 = vmax.f32 %v1219, 0.0
        %v1640 = vmax.f32 %v1330, 0.0
        %v1641 = vmax.f32 %v1332, 0.0
        %v1642 = vmax.f32 %v1443, 0.0
        %v1643 = vmax.f32 %v1445, 0.0
        %v1644 = vmax.f32 %v1556, 0.0
        %v1645 = vmax.f32 %v1558, 0.0
        %v1646 = vmax.f32 %v1223, 0.0
        %v1647 = vmax.f32 %v1225, 0.0
        %v1648 = vmax.f32 %v1336, 0.0
        %v1649 = vmax.f32 %v1338, 0.0
        %v1650 = vmax.f32 %v1449, 0.0
        %v1651 = vmax.f32 %v1451, 0.0
        %v1652 = vmax.f32 %v1562, 0.0
        %v1653 = vmax.f32 %v1564, 0.0
        %v1654 = vmax.f32 %v1227, 0.0
        %v1655 = vmax.f32 %v1229, 0.0
        %v1656 = vmax.f32 %v1340, 0.0
        %v1657 = vmax.f32 %v1342, 0.0
        %v1658 = vmax.f32 %v1453, 0.0
        %v1659 = vmax.f32 %v1455, 0.0
        %v1660 = vmax.f32 %v1566, 0.0
        %v1661 = vmax.f32 %v1568, 0.0
        %v1662 = vmax.f32 %v1233, 0.0
        %v1663 = vmax.f32 %v1235, 0.0
        %v1664 = vmax.f32 %v1346, 0.0
        %v1665 = vmax.f32 %v1348, 0.0
        %v1666 = vmax.f32 %v1459, 0.0
        %v1667 = vmax.f32 %v1461, 0.0
        %v1668 = vmax.f32 %v1572, 0.0
        %v1669 = vmax.f32 %v1574, 0.0
        %v1670 = vmax.f32 %v1237, 0.0
        %v1671 = vmax.f32 %v1239, 0.0
        %v1672 = vmax.f32 %v1350, 0.0
        %v1673 = vmax.f32 %v1352, 0.0
        %v1674 = vmax.f32 %v1463, 0.0
        %v1675 = vmax.f32 %v1465, 0.0
        %v1676 = vmax.f32 %v1576, 0.0
        %v1677 = vmax.f32 %v1578, 0.0
        %v1678 = vmax.f32 %v1243, 0.0
        %v1679 = vmax.f32 %v1245, 0.0
        %v1680 = vmax.f32 %v1356, 0.0
        %v1681 = vmax.f32 %v1358, 0.0
        %v1682 = vmax.f32 %v1469, 0.0
        %v1683 = vmax.f32 %v1471, 0.0
        %v1684 = vmax.f32 %v1582, 0.0
        %v1685 = vmax.f32 %v1584, 0.0
        %v1686 = vmax.f32 %v1247, 0.0
        %v1687 = vmax.f32 %v1249, 0.0
        %v1688 = vmax.f32 %v1360, 0.0
        %v1689 = vmax.f32 %v1362, 0.0
        %v1690 = vmax.f32 %v1473, 0.0
        %v1691 = vmax.f32 %v1475, 0.0
        %v1692 = vmax.f32 %v1586, 0.0
        %v1693 = vmax.f32 %v1588, 0.0
        %v1694 = vmax.f32 %v1253, 0.0
        %v1695 = vmax.f32 %v1255, 0.0
        %v1696 = vmax.f32 %v1366, 0.0
        %v1697 = vmax.f32 %v1368, 0.0
        %v1698 = vmax.f32 %v1479, 0.0
        %v1699 = vmax.f32 %v1481, 0.0
        %v1700 = vmax.f32 %v1592, 0.0
        %v1701 = vmax.f32 %v1594, 0.0
        %v1702 = vmax.f32 %v1257, 0.0
        %v1703 = vmax.f32 %v1259, 0.0
        %v1704 = vmax.f32 %v1370, 0.0
        %v1705 = vmax.f32 %v1372, 0.0
        %v1706 = vmax.f32 %v1483, 0.0
        %v1707 = vmax.f32 %v1485, 0.0
        %v1708 = vmax.f32 %v1596, 0.0
        %v1709 = vmax.f32 %v1598, 0.0
        %v1710 = vmax.f32 %v1263, 0.0
        %v1711 = vmax.f32 %v1265, 0.0
        %v1712 = vmax.f32 %v1376, 0.0
        %v1713 = vmax.f32 %v1378, 0.0
        %v1714 = vmax.f32 %v1489, 0.0
        %v1715 = vmax.f32 %v1491, 0.0
        %v1716 = vmax.f32 %v1602, 0.0
        %v1717 = vmax.f32 %v1604, 0.0
        %v1718 = vmax.f32 %v1267, 0.0
        %v1719 = vmax.f32 %v1269, 0.0
        %v1720 = vmax.f32 %v1380, 0.0
        %v1721 = vmax.f32 %v1382, 0.0
        %v1722 = vmax.f32 %v1493, 0.0
        %v1723 = vmax.f32 %v1495, 0.0
        %v1724 = vmax.f32 %v1606, 0.0
        %v1725 = vmax.f32 %v1608, 0.0
        %v1726 = vmax.f32 %v1273, 0.0
        %v1727 = vmax.f32 %v1275, 0.0
        %v1728 = vmax.f32 %v1386, 0.0
        %v1729 = vmax.f32 %v1388, 0.0
        %v1730 = vmax.f32 %v1499, 0.0
        %v1731 = vmax.f32 %v1501, 0.0
        %v1732 = vmax.f32 %v1612, 0.0
        %v1733 = vmax.f32 %v1614, 0.0
        %v1734 = vmax.f32 %v1277, 0.0
        %v1735 = vmax.f32 %v1279, 0.0
        %v1736 = vmax.f32 %v1390, 0.0
        %v1737 = vmax.f32 %v1392, 0.0
        %v1738 = vmax.f32 %v1503, 0.0
        %v1739 = vmax.f32 %v1505, 0.0
        %v1740 = vmax.f32 %v1616, 0.0
        %v1741 = vmax.f32 %v1618, 0.0
        %v1742 = vmax.f32 %v1283, 0.0
        %v1743 = vmax.f32 %v1285, 0.0
        %v1744 = vmax.f32 %v1396, 0.0
        %v1745 = vmax.f32 %v1398, 0.0
        %v1746 = vmax.f32 %v1509, 0.0
        %v1747 = vmax.f32 %v1511, 0.0
        %v1748 = vmax.f32 %v1622, 0.0
        %v1749 = vmax.f32 %v1624, 0.0
        %v1750 = vmax.f32 %v1287, 0.0
        %v1751 = vmax.f32 %v1289, 0.0
        %v1752 = vmax.f32 %v1400, 0.0
        %v1753 = vmax.f32 %v1402, 0.0
        %v1754 = vmax.f32 %v1513, 0.0
        %v1755 = vmax.f32 %v1515, 0.0
        %v1756 = vmax.f32 %v1626, 0.0
        %v1757 = vmax.f32 %v1628, 0.0
        %v1758 = vmax.f32 %v1630, %v1638
        %v1759 = vmax.f32 %v1758, %v1646
        %v1760 = vmax.f32 %v1759, %v1654
        %v1761 = vmax.f32 %v1760, %v1662
        %v1762 = vmax.f32 %v1761, %v1670
        %v1763 = vmax.f32 %v1762, %v1678
        %v1764 = vmax.f32 %v1763, %v1686
        %v1765 = vmax.f32 %v1764, %v1694
        %v1766 = vmax.f32 %v1765, %v1702
        %v1767 = vmax.f32 %v1766, %v1710
        %v1768 = vmax.f32 %v1767, %v1718
        %v1769 = vmax.f32 %v1768, %v1726
        %v1770 = vmax.f32 %v1769, %v1734
        %v1771 = vmax.f32 %v1770, %v1742
        %v1772 = vmax.f32 %v1771, %v1750
        %v1773 = vrot.slane %v1772, 4
        %v1774 = vmax.f32 %v1772, %v1773
        %v1775 = vrot.slane %v1774, 2
        %v1776 = vmax.f32 %v1774, %v1775
        %v1777 = vrot.slane %v1776, 1
        %v1778 = vmax.f32 %v1776, %v1777
        %v1779 = vmax.f32 %v1631, %v1639
        %v1780 = vmax.f32 %v1779, %v1647
        %v1781 = vmax.f32 %v1780, %v1655
        %v1782 = vmax.f32 %v1781, %v1663
        %v1783 = vmax.f32 %v1782, %v1671
        %v1784 = vmax.f32 %v1783, %v1679
        %v1785 = vmax.f32 %v1784, %v1687
        %v1786 = vmax.f32 %v1785, %v1695
        %v1787 = vmax.f32 %v1786, %v1703
        %v1788 = vmax.f32 %v1787, %v1711
        %v1789 = vmax.f32 %v1788, %v1719
        %v1790 = vmax.f32 %v1789, %v1727
        %v1791 = vmax.f32 %v1790, %v1735
        %v1792 = vmax.f32 %v1791, %v1743
        %v1793 = vmax.f32 %v1792, %v1751
        %v1794 = vrot.slane %v1793, 4
        %v1795 = vmax.f32 %v1793, %v1794
        %v1796 = vrot.slane %v1795, 2
        %v1797 = vmax.f32 %v1795, %v1796
        %v1798 = vrot.slane %v1797, 1
        %v1799 = vmax.f32 %v1797, %v1798
        %v1800 = vmax.f32 %v1632, %v1640
        %v1801 = vmax.f32 %v1800, %v1648
        %v1802 = vmax.f32 %v1801, %v1656
        %v1803 = vmax.f32 %v1802, %v1664
        %v1804 = vmax.f32 %v1803, %v1672
        %v1805 = vmax.f32 %v1804, %v1680
        %v1806 = vmax.f32 %v1805, %v1688
        %v1807 = vmax.f32 %v1806, %v1696
        %v1808 = vmax.f32 %v1807, %v1704
        %v1809 = vmax.f32 %v1808, %v1712
        %v1810 = vmax.f32 %v1809, %v1720
        %v1811 = vmax.f32 %v1810, %v1728
        %v1812 = vmax.f32 %v1811, %v1736
        %v1813 = vmax.f32 %v1812, %v1744
        %v1814 = vmax.f32 %v1813, %v1752
        %v1815 = vrot.slane %v1814, 4
        %v1816 = vmax.f32 %v1814, %v1815
        %v1817 = vrot.slane %v1816, 2
        %v1818 = vmax.f32 %v1816, %v1817
        %v1819 = vrot.slane %v1818, 1
        %v1820 = vmax.f32 %v1818, %v1819
        %v1821 = vmax.f32 %v1633, %v1641
        %v1822 = vmax.f32 %v1821, %v1649
        %v1823 = vmax.f32 %v1822, %v1657
        %v1824 = vmax.f32 %v1823, %v1665
        %v1825 = vmax.f32 %v1824, %v1673
        %v1826 = vmax.f32 %v1825, %v1681
        %v1827 = vmax.f32 %v1826, %v1689
        %v1828 = vmax.f32 %v1827, %v1697
        %v1829 = vmax.f32 %v1828, %v1705
        %v1830 = vmax.f32 %v1829, %v1713
        %v1831 = vmax.f32 %v1830, %v1721
        %v1832 = vmax.f32 %v1831, %v1729
        %v1833 = vmax.f32 %v1832, %v1737
        %v1834 = vmax.f32 %v1833, %v1745
        %v1835 = vmax.f32 %v1834, %v1753
        %v1836 = vrot.slane %v1835, 4
        %v1837 = vmax.f32 %v1835, %v1836
        %v1838 = vrot.slane %v1837, 2
        %v1839 = vmax.f32 %v1837, %v1838
        %v1840 = vrot.slane %v1839, 1
        %v1841 = vmax.f32 %v1839, %v1840
        %v1842 = vmax.f32 %v1634, %v1642
        %v1843 = vmax.f32 %v1842, %v1650
        %v1844 = vmax.f32 %v1843, %v1658
        %v1845 = vmax.f32 %v1844, %v1666
        %v1846 = vmax.f32 %v1845, %v1674
        %v1847 = vmax.f32 %v1846, %v1682
        %v1848 = vmax.f32 %v1847, %v1690
        %v1849 = vmax.f32 %v1848, %v1698
        %v1850 = vmax.f32 %v1849, %v1706
        %v1851 = vmax.f32 %v1850, %v1714
        %v1852 = vmax.f32 %v1851, %v1722
        %v1853 = vmax.f32 %v1852, %v1730
        %v1854 = vmax.f32 %v1853, %v1738
        %v1855 = vmax.f32 %v1854, %v1746
        %v1856 = vmax.f32 %v1855, %v1754
        %v1857 = vrot.slane %v1856, 4
        %v1858 = vmax.f32 %v1856, %v1857
        %v1859 = vrot.slane %v1858, 2
        %v1860 = vmax.f32 %v1858, %v1859
        %v1861 = vrot.slane %v1860, 1
        %v1862 = vmax.f32 %v1860, %v1861
        %v1863 = vmax.f32 %v1635, %v1643
        %v1864 = vmax.f32 %v1863, %v1651
        %v1865 = vmax.f32 %v1864, %v1659
        %v1866 = vmax.f32 %v1865, %v1667
        %v1867 = vmax.f32 %v1866, %v1675
        %v1868 = vmax.f32 %v1867, %v1683
        %v1869 = vmax.f32 %v1868, %v1691
        %v1870 = vmax.f32 %v1869, %v1699
        %v1871 = vmax.f32 %v1870, %v1707
        %v1872 = vmax.f32 %v1871, %v1715
        %v1873 = vmax.f32 %v1872, %v1723
        %v1874 = vmax.f32 %v1873, %v1731
        %v1875 = vmax.f32 %v1874, %v1739
        %v1876 = vmax.f32 %v1875, %v1747
        %v1877 = vmax.f32 %v1876, %v1755
        %v1878 = vrot.slane %v1877, 4
        %v1879 = vmax.f32 %v1877, %v1878
        %v1880 = vrot.slane %v1879, 2
        %v1881 = vmax.f32 %v1879, %v1880
        %v1882 = vrot.slane %v1881, 1
        %v1883 = vmax.f32 %v1881, %v1882
        %v1884 = vmax.f32 %v1636, %v1644
        %v1885 = vmax.f32 %v1884, %v1652
        %v1886 = vmax.f32 %v1885, %v1660
        %v1887 = vmax.f32 %v1886, %v1668
        %v1888 = vmax.f32 %v1887, %v1676
        %v1889 = vmax.f32 %v1888, %v1684
        %v1890 = vmax.f32 %v1889, %v1692
        %v1891 = vmax.f32 %v1890, %v1700
        %v1892 = vmax.f32 %v1891, %v1708
        %v1893 = vmax.f32 %v1892, %v1716
        %v1894 = vmax.f32 %v1893, %v1724
        %v1895 = vmax.f32 %v1894, %v1732
        %v1896 = vmax.f32 %v1895, %v1740
        %v1897 = vmax.f32 %v1896, %v1748
        %v1898 = vmax.f32 %v1897, %v1756
        %v1899 = vrot.slane %v1898, 4
        %v1900 = vmax.f32 %v1898, %v1899
        %v1901 = vrot.slane %v1900, 2
        %v1902 = vmax.f32 %v1900, %v1901
        %v1903 = vrot.slane %v1902, 1
        %v1904 = vmax.f32 %v1902, %v1903
        %v1905 = vmax.f32 %v1637, %v1645
        %v1906 = vmax.f32 %v1905, %v1653
        %v1907 = vmax.f32 %v1906, %v1661
        %v1908 = vmax.f32 %v1907, %v1669
        %v1909 = vmax.f32 %v1908, %v1677
        %v1910 = vmax.f32 %v1909, %v1685
        %v1911 = vmax.f32 %v1910, %v1693
        %v1912 = vmax.f32 %v1911, %v1701
        %v1913 = vmax.f32 %v1912, %v1709
        %v1914 = vmax.f32 %v1913, %v1717
        %v1915 = vmax.f32 %v1914, %v1725
        %v1916 = vmax.f32 %v1915, %v1733
        %v1917 = vmax.f32 %v1916, %v1741
        %v1918 = vmax.f32 %v1917, %v1749
        %v1919 = vmax.f32 %v1918, %v1757
        %v1920 = vrot.slane %v1919, 4
        %v1921 = vmax.f32 %v1919, %v1920
        %v1922 = vrot.slane %v1921, 2
        %v1923 = vmax.f32 %v1921, %v1922
        %v1924 = vrot.slane %v1923, 1
        %v1925 = vmax.f32 %v1923, %v1924
        %p1926 = scmp.eq.s32.totalorder %s27, 0
        // Predicated region
        $region53: #{tpu_custom_call.1} parent=47 // pred_check
          %p1927 = pneg %p1926
        $region54: #{tpu_custom_call.1} parent=47 // pred_check_branch
          %1929 = sbr.rel (%p1927) target = $region56
        $region55: #{tpu_custom_call.1} parent=47 // pred_region
          %1930 = vst [vmem:[%s309] sm:$0xff] 0.0
        $region56: #{tpu_custom_call.1} parent=47 // pred_fallthru
          _
        %v1931 = vld [vmem:[%s309] sm:$0xff]
        %v1940 = vcombine.low %v1778, %v1799
        %v1941 = vcombine.low %v1820, %v1841
        %v1942 = vcombine.low %v1862, %v1883
        %v1943 = vcombine.low %v1904, %v1925
        %v1945 = vunpack.c.l.s4 1966171168
        %v1946 = vunpack.c.0.s8 %v1945
        %v1947 = vlaneseq
        %v1948 = vshrl.u32 %v1947, 7
        %v1949 = vsub.s32 %v1946, %v1948
        %v1950 = vrot.slane %v1940, %v1949
        %v1952 = vunpack.c.l.s4 1966171168
        %v1953 = vunpack.c.0.s8 %v1952
        %v1954 = vlaneseq
        %v1955 = vshrl.u32 %v1954, 7
        %v1956 = vsub.s32 %v1953, %v1955
        %v1957 = vrot.slane %v1941, %v1956
        %v1959 = vunpack.c.l.s4 1966171168
        %v1960 = vunpack.c.0.s8 %v1959
        %v1961 = vlaneseq
        %v1962 = vshrl.u32 %v1961, 7
        %v1963 = vsub.s32 %v1960, %v1962
        %v1964 = vrot.slane %v1942, %v1963
        %v1966 = vunpack.c.l.s4 1966171168
        %v1967 = vunpack.c.0.s8 %v1966
        %v1968 = vlaneseq
        %v1969 = vshrl.u32 %v1968, 7
        %v1970 = vsub.s32 %v1967, %v1969
        %v1971 = vrot.slane %v1943, %v1970
        %v1972 = vcombine.low %v1950, %v1957
        %v1973 = vcombine.low %v1964, %v1971
        %v1975 = vunpack.c.l.s4 1966171168
        %v1976 = vunpack.c.0.s8 %v1975
        %v1977 = vlaneseq
        %v1978 = vshrl.u32 %v1977, 7
        %v1979 = vsub.s32 %v1976, %v1978
        %v1980 = vrot.slane %v1972, %v1979
        %v1982 = vunpack.c.l.s4 1966171168
        %v1983 = vunpack.c.0.s8 %v1982
        %v1984 = vlaneseq
        %v1985 = vshrl.u32 %v1984, 7
        %v1986 = vsub.s32 %v1983, %v1985
        %v1987 = vrot.slane %v1973, %v1986
        %v1988 = vcombine.low %v1980, %v1987
        %v1990 = vmax.f32 %v1931, %v1988
        %1991 = vst [vmem:[%s309] sm:$0xff] %v1990
        %s1992 = sand.u32 %s196, 1
        %s1993 = scalar_lea.sflag [#allocation4], %s1992
        %s1994 = sand.u32 %s196, 1
        %s1995 = smul.addr %s1994, 8
        %s1996 = scalar_lea.vmem [#allocation5], %s1995
        // Predicated region
        $region57: #{tpu_custom_call.1} parent=47 // pred_check
          %p1997 = pneg %p206
        $region58: #{tpu_custom_call.1} parent=47 // pred_check_branch
          %1999 = sbr.rel (%p1997) target = $region60
        $region59: #{tpu_custom_call.1} parent=47 // pred_region
          %s2001 = ssub.s32 128, 128
          %2002 = vsyncadd %s1993, %s2001
          %s2003 = smul.addr %s26, 8
          %s2004 = smul.addr %s2003, 16
          %s2005 = scalar_lea.hbm %s7, %s2004
          %s2007 = sshll.u32 %s1996, 4
          %s2008 = int_to_ptr.vmem [resolvable:$true] %s2007
          %2010 = dma.vmem_to_hbm [thread:$0]  %s2008, 128, %s2005, %s1993
        $region60: #{tpu_custom_call.1} parent=47 // pred_fallthru
          _
      $region48: #{tpu_custom_call.1} parent=5 // pred_fallthru
        _
      %p2011 = scmp.le.s32.totalorder 2, %s17
      // Predicated region
      $region61: #{tpu_custom_call.1} parent=5 // pred_check
        %p2012 = pneg %p2011
      $region62: #{tpu_custom_call.1} parent=5 // pred_check_branch
        %2014 = sbr.rel (%p2012) target = $region64
      $region63: #{tpu_custom_call.1} parent=5 // pred_region
        %s2015 = ssub.s32 %s17, 2
        // Predicated region
        $region65: #{tpu_custom_call.1} parent=63 // pred_check
          %p2016 = pneg %p212
        $region66: #{tpu_custom_call.1} parent=63 // pred_check_branch
          %2018 = sbr.rel (%p2016) target = $region68
        $region67: #{tpu_custom_call.1} parent=63 // pred_region
          %s2019 = sand.u32 %s197, 1
          %s2020 = scalar_lea.sflag [#allocation4], %s2019
          %s2021 = sand.u32 %s197, 1
          %s2022 = smul.addr %s2021, 8
          %s2023 = scalar_lea.vmem [#allocation5], %s2022
          %2024 = dma.done %s2020, 128
        $region68: #{tpu_custom_call.1} parent=63 // pred_fallthru
          _
      $region64: #{tpu_custom_call.1} parent=5 // pred_fallthru
        _
    $region6: #{tpu_custom_call.1} parent=1 // loop_footer
      %s21 = sadd.s32 1, %s17
    $region7: #{tpu_custom_call.1} parent=1 // loop_footer_branch
      %16 = sbr.rel target = $region3
    $region8: #{tpu_custom_call.1} parent=1 // loop_exit
      _
    %2025 = vsyncpa [#allocation3], 1
    %s2026 = scalar_lea.sflag [#allocation3], 1
    %2027 = vsyncpa %s2026, 1
    %2028 = vsyncpa [#allocation4], 1
    %s2029 = scalar_lea.sflag [#allocation4], 1
    %2030 = vsyncpa %s2029, 1

</llo_original>
